<compile_context>
chip_gen: v5e
topology: v5e:2x2
jax: 0.10.0
libtpu: 0.0.40
codegen_flags: <defaults>
</compile_context>

<pallas_src>
import jax
import jax.numpy as jnp
from jax.experimental import pallas as pl
from jax.experimental.pallas import tpu as pltpu

DIM = 32                          # model dim (c)
EXPANSION = 2
INNER = DIM * EXPANSION           # 64
PACK = 2 * INNER                  # 128: two batches lane-packed
KERNEL = 31
# calc_same_padding(31) -> (15, 15)
PAD_L = KERNEL // 2
PAD_R = KERNEL // 2 - (KERNEL + 1) % 2
PAD_TOP = ((PAD_L + 7) // 8) * 8  # 16: sublane-aligned base for the interior store
LN_EPS = 1e-5
BN_EPS = 1e-5
MATMUL_DTYPE = jnp.bfloat16       # MXU matmul inputs; accumulation stays f32


def _pick_time_chunk(n, cap=64):
    """Largest divisor of n that is a multiple of 8 and <= cap (n % 8 == 0)."""
    best = 8
    for c in range(8, min(n, cap) + 1, 8):
        if n % c == 0:
            best = c
    return best


def _conformer_conv_kernel(x_ref, w1_ref, b1_ref, dww_ref, dwb_ref,
                           w2_ref, b2_ref, o_ref, pad_ref):
    G, N, D = x_ref.shape            # static block shape
    GH = G // 2                      # lane-packed batch pairs
    R = G * N

    # ---- LayerNorm over channels (affine folded into w1/b1) ----
    x = x_ref[...].reshape(R, D)
    mean = jnp.mean(x, axis=-1, keepdims=True)
    var = jnp.mean((x - mean) ** 2, axis=-1, keepdims=True)
    xn = (x - mean) * jax.lax.rsqrt(var + LN_EPS)

    # ---- pointwise Conv1d dim -> 2*inner (1x1 == matmul), then GLU ----
    h = jnp.dot(xn.astype(w1_ref.dtype), w1_ref[...],
                preferred_element_type=jnp.float32) + b1_ref[...]
    g = h[:, :INNER] * jax.nn.sigmoid(h[:, INNER:])            # (R, INNER)

    # ---- pack batch pairs into lanes: 2p -> [0,64), 2p+1 -> [64,128) ----
    g4 = g.reshape(GH, 2, N, INNER)
    packed = jnp.concatenate([g4[:, 0], g4[:, 1]], axis=-1)    # (GH, N, PACK)

    # ---- padded depthwise scratch.  Pad blocks are re-zeroed EVERY step:
    # scratch is per-core and the batch axis is "parallel", so never rely on
    # scratch persistence across grid steps / TensorCores. ----
    zpad = jnp.zeros((GH, PAD_TOP, PACK), jnp.float32)
    pad_ref[:, :PAD_TOP, :] = zpad
    pad_ref[:, PAD_TOP + N:, :] = zpad
    pad_ref[:, PAD_TOP:PAD_TOP + N, :] = packed                # sublane-aligned store

    base = PAD_TOP - PAD_L                                     # = 1
    TC = _pick_time_chunk(N)                                   # static time chunk
    n_t = N // TC

    def dw_chunk(p, t0):
        """31-tap depthwise + bias + Swish + 1x1 conv2 for one (pair, time) chunk."""
        r0 = base + t0
        # TODO(synk): training-mode BatchNorm (batch stats over (B, N)) is not
        # implemented; eval-mode running stats are folded into dww/dwb.
        acc = pad_ref[p, pl.ds(r0, TC), :] * dww_ref[0:1, :]   # tap 0 initializes acc
        for k in range(1, KERNEL):                             # static 31-tap unroll
            acc = acc + pad_ref[p, pl.ds(r0 + k, TC), :] * dww_ref[k:k + 1, :]
        y = acc + dwb_ref[...]                                 # BN folded in
        y = y * jax.nn.sigmoid(y)                              # Swish (packed lanes)
        z = jnp.dot(y.astype(w2_ref.dtype), w2_ref[...],       # blockdiag(w2, w2)
                    preferred_element_type=jnp.float32) + b2_ref[...]
        o_ref[p, pl.ds(t0, TC), :] = z.astype(o_ref.dtype)     # Dropout(p=0) = identity

    if n_t == 1:
        def body(p, c):
            dw_chunk(p, 0)
            return c
        jax.lax.fori_loop(0, GH, body, 0)
    else:
        def body(i, c):
            p = i // n_t
            t0 = pl.multiple_of((i % n_t) * TC, TC)
            dw_chunk(p, t0)
            return c
        jax.lax.fori_loop(0, GH * n_t, body, 0)


def fold_params(params):
    """Fold LN affine into conv1 and BN(eval) scale/shift into the depthwise conv."""
    (ln_g, ln_b, w1, b1, dww, dwb, bn_scale, bn_shift, w2, b2) = params
    w1f = ln_g.reshape(DIM, 1) * w1                                     # (DIM, 2*INNER)
    b1f = jnp.matmul(ln_b, w1, precision=jax.lax.Precision.HIGHEST) + b1
    dwwf = dww * bn_scale                                               # (KERNEL, INNER)
    dwbf = dwb * bn_scale + bn_shift                                    # (1, INNER)
    return w1f, b1f, dwwf, dwbf, w2, b2


def _pick_group(batch, seq, row_budget):
    """Largest even G dividing `batch` (even) with G*seq <= row_budget.

    Prefers >= 2 grid steps with an even step count (v7x: 2 TensorCores share
    the 'parallel' batch axis).  Falls back to G=2 (minimum packed pair)."""
    cands = [g for g in range(2, batch + 1, 2)
             if batch % g == 0 and g * seq <= row_budget]
    if not cands:
        return 2
    even_steps = [g for g in cands if (batch // g) >= 2 and (batch // g) % 2 == 0]
    if even_steps:
        return max(even_steps)
    multi = [g for g in cands if (batch // g) >= 2]
    return max(multi) if multi else max(cands)


def conformer_conv_module(x, params, *, row_budget=4096):
    """x: (B, N, D) float32, channels-last ("b n c"). Returns (B, N, D)."""
    B, N, D = x.shape
    assert D == DIM
    assert N % 8 == 0, "sequence length must be a multiple of 8 (sublane tiling)"

    # Batches are processed in lane-packed pairs; pad an ignored zero batch if odd.
    B_pad = B + (B % 2)
    if B_pad != B:
        x = jnp.concatenate([x, jnp.zeros((B_pad - B, N, D), x.dtype)], axis=0)

    w1f, b1f, dwwf, dwbf, w2, b2 = fold_params(params)
    w1p = w1f.astype(MATMUL_DTYPE)                       # (DIM, 2*INNER)
    dwwp = jnp.concatenate([dwwf, dwwf], axis=-1)        # (KERNEL, PACK)
    dwbp = jnp.concatenate([dwbf, dwbf], axis=-1)        # (1, PACK)
    zblk = jnp.zeros((INNER, DIM), w2.dtype)
    w2p = jnp.concatenate(                               # blockdiag(w2, w2): (PACK, 2*DIM)
        [jnp.concatenate([w2, zblk], axis=1),
         jnp.concatenate([zblk, w2], axis=1)], axis=0).astype(MATMUL_DTYPE)
    b2p = jnp.concatenate([b2, b2], axis=-1)             # (1, 2*DIM)

    G = _pick_group(B_pad, N, row_budget)
    GH = G // 2
    grid = (B_pad // G,)

    pspec = lambda a: pl.BlockSpec(a.shape, lambda b: (0, 0))   # full 2-D param block
    grid_spec = pltpu.PrefetchScalarGridSpec(
        num_scalar_prefetch=0,
        grid=grid,
        in_specs=[
            pl.BlockSpec((G, N, D), lambda b: (b, 0, 0)),       # x: G batches per step
            pspec(w1p), pspec(b1f), pspec(dwwp), pspec(dwbp),
            pspec(w2p), pspec(b2p),
        ],
        out_specs=pl.BlockSpec((GH, N, 2 * DIM), lambda b: (b, 0, 0)),
        scratch_shapes=[pltpu.VMEM((GH, N + 2 * PAD_TOP, PACK), jnp.float32)],
    )
    out_packed = pl.pallas_call(
        _conformer_conv_kernel,
        out_shape=jax.ShapeDtypeStruct((B_pad // 2, N, 2 * DIM), x.dtype),
        grid_spec=grid_spec,
        compiler_params=pltpu.CompilerParams(dimension_semantics=("parallel",)),
    )(x, w1p, b1f, dwwp, dwbp, w2p, b2p)

    # Un-pack the lane-paired output: row q holds batch 2q in cols [0, D) and
    # batch 2q+1 in cols [D, 2D).  Pure layout plumbing, outside the kernel.
    out = (out_packed.reshape(B_pad // 2, N, 2, DIM)
           .transpose(0, 2, 1, 3).reshape(B_pad, N, DIM))
    return out[:B]


def _reference_f32(x, params):
    """Pure-JAX full-f32 reference mirroring the PyTorch module (channels-last)."""
    (ln_g, ln_b, w1, b1, dww, dwb, bn_scale, bn_shift, w2, b2) = params
    hp = jax.lax.Precision.HIGHEST
    mean = jnp.mean(x, axis=-1, keepdims=True)
    var = jnp.mean((x - mean) ** 2, axis=-1, keepdims=True)
    xn = (x - mean) * jax.lax.rsqrt(var + LN_EPS) * ln_g + ln_b
    h = jnp.einsum('bnd,de->bne', xn, w1, precision=hp) + b1
    g = h[..., :INNER] * jax.nn.sigmoid(h[..., INNER:])
    gp = jnp.pad(g, ((0, 0), (PAD_L, PAD_R), (0, 0)))
    N = x.shape[1]
    y = sum(gp[:, k:k + N, :] * dww[k] for k in range(KERNEL)) + dwb
    y = y * bn_scale + bn_shift
    y = y * jax.nn.sigmoid(y)
    return jnp.einsum('bne,ed->bnd', y, w2, precision=hp) + b2


def _reference_folded(x, params):
    """Reference with the kernel's exact semantics: LN/BN folds + bf16 matmul inputs."""
    w1f, b1f, dwwf, dwbf, w2, b2 = fold_params(params)
    mean = jnp.mean(x, axis=-1, keepdims=True)
    var = jnp.mean((x - mean) ** 2, axis=-1, keepdims=True)
    xn = (x - mean) * jax.lax.rsqrt(var + LN_EPS)
    h = jnp.einsum('bnd,de->bne', xn.astype(MATMUL_DTYPE), w1f.astype(MATMUL_DTYPE),
                   preferred_element_type=jnp.float32) + b1f
    g = h[..., :INNER] * jax.nn.sigmoid(h[..., INNER:])
    gp = jnp.pad(g, ((0, 0), (PAD_L, PAD_R), (0, 0)))
    N = x.shape[1]
    y = sum(gp[:, k:k + N, :] * dwwf[k] for k in range(KERNEL)) + dwbf
    y = y * jax.nn.sigmoid(y)
    return jnp.einsum('bne,ed->bnd', y.astype(MATMUL_DTYPE), w2.astype(MATMUL_DTYPE),
                      preferred_element_type=jnp.float32) + b2


def make_params(key):
    ks = jax.random.split(key, 12)
    ln_g = jax.random.normal(ks[0], (1, DIM), jnp.float32) * 0.1 + 1.0
    ln_b = jax.random.normal(ks[1], (1, DIM), jnp.float32) * 0.1
    # Conv1d(dim, 2*inner, 1): torch weight (2*inner, dim, 1) -> stored as (dim, 2*inner)
    w1 = jax.random.normal(ks[2], (DIM, 2 * INNER), jnp.float32) * 0.1
    b1 = jax.random.normal(ks[3], (1, 2 * INNER), jnp.float32) * 0.1
    # Depthwise Conv1d(inner, inner, 31, groups=inner): torch (inner, 1, 31) -> (31, inner)
    dww = jax.random.normal(ks[4], (KERNEL, INNER), jnp.float32) * 0.1
    dwb = jax.random.normal(ks[5], (1, INNER), jnp.float32) * 0.1
    # BatchNorm1d(inner), eval mode: fold (gamma, beta, running_mean, running_var)
    bn_gamma = jax.random.normal(ks[6], (1, INNER), jnp.float32) * 0.1 + 1.0
    bn_beta = jax.random.normal(ks[7], (1, INNER), jnp.float32) * 0.1
    bn_mean = jax.random.normal(ks[8], (1, INNER), jnp.float32) * 0.1
    bn_var = jnp.abs(jax.random.normal(ks[9], (1, INNER), jnp.float32)) * 0.1 + 0.5
    bn_scale = bn_gamma / jnp.sqrt(bn_var + BN_EPS)
    bn_shift = bn_beta - bn_mean * bn_scale
    # Conv1d(inner, dim, 1): torch weight (dim, inner, 1) -> (inner, dim)
    w2 = jax.random.normal(ks[10], (INNER, DIM), jnp.float32) * 0.1
    b2 = jax.random.normal(ks[11], (1, DIM), jnp.float32) * 0.1
    return (ln_g, ln_b, w1, b1, dww, dwb, bn_scale, bn_shift, w2, b2)


if __name__ == "__main__":
    key = jax.random.PRNGKey(0)
    kx, kp, kx2 = jax.random.split(key, 3)
    params = make_params(kp)

    # Main check: B=8, N=16 -> G=4 (two "parallel" grid steps), lane-packed pairs.
    B, N = 8, 16
    x = jax.random.normal(kx, (B, N, DIM), jnp.float32)    # "b n c"
    out = jax.block_until_ready(conformer_conv_module(x, params))
    assert out.shape == (B, N, DIM)

    ref_tight = _reference_folded(x, params)
    assert jnp.allclose(out, ref_tight, atol=5e-3, rtol=5e-3), \
        "mismatch vs folded / bf16-matmul reference"
    ref_f32 = _reference_f32(x, params)
    assert jnp.allclose(out, ref_f32, atol=3e-2, rtol=3e-2), \
        "drift vs full-f32 reference too large"

    # Odd batch exercises the zero-batch padding path (B_pad=4, G=2, 2 steps).
    B2, N2 = 3, 8
    x2 = jax.random.normal(kx2, (B2, N2, DIM), jnp.float32)
    out2 = jax.block_until_ready(conformer_conv_module(x2, params))
    assert out2.shape == (B2, N2, DIM)
    assert jnp.allclose(out2, _reference_folded(x2, params), atol=5e-3, rtol=5e-3), \
        "mismatch on odd-batch path"

    print("KERNEL_OK")
</pallas_src>

<mosaic_0001>
module attributes {stable_mosaic.version = 11 : i64} {
  func.func @_conformer_conv_kernel(%arg0: i32, %arg1: memref<4x16x32xf32, #tpu.memory_space<vmem>>, %arg2: memref<32x128xbf16, #tpu.memory_space<vmem>>, %arg3: memref<1x128xf32, #tpu.memory_space<vmem>>, %arg4: memref<31x128xf32, #tpu.memory_space<vmem>>, %arg5: memref<1x128xf32, #tpu.memory_space<vmem>>, %arg6: memref<128x64xbf16, #tpu.memory_space<vmem>>, %arg7: memref<1x64xf32, #tpu.memory_space<vmem>>, %arg8: memref<2x16x64xf32, #tpu.memory_space<vmem>>, %arg9: memref<2x48x128xf32, #tpu.memory_space<vmem>>) attributes {dimension_semantics = [#tpu.dimension_semantics<parallel>], iteration_bounds = array<i64: 2>, scalar_prefetch = 0 : i64, scratch_operands = 1 : i64, tpu.core_type = #tpu.core_type<tc>, window_params = [{transform_indices = @transform_0, window_bounds = array<i64: 4, 16, 32>}, {pipeline_mode = #tpu.pipeline_mode<synchronous>, transform_indices = @transform_1, window_bounds = array<i64: 32, 128>}, {pipeline_mode = #tpu.pipeline_mode<synchronous>, transform_indices = @transform_2, window_bounds = array<i64: 1, 128>}, {pipeline_mode = #tpu.pipeline_mode<synchronous>, transform_indices = @transform_3, window_bounds = array<i64: 31, 128>}, {pipeline_mode = #tpu.pipeline_mode<synchronous>, transform_indices = @transform_4, window_bounds = array<i64: 1, 128>}, {pipeline_mode = #tpu.pipeline_mode<synchronous>, transform_indices = @transform_5, window_bounds = array<i64: 128, 64>}, {pipeline_mode = #tpu.pipeline_mode<synchronous>, transform_indices = @transform_6, window_bounds = array<i64: 1, 64>}, {transform_indices = @transform_7, window_bounds = array<i64: 2, 16, 64>}]} {
    %c0 = arith.constant 0 : index
    %c0_0 = arith.constant 0 : index
    %c0_1 = arith.constant 0 : index
    %0 = vector.load %arg1[%c0, %c0_0, %c0_1] : memref<4x16x32xf32, #tpu.memory_space<vmem>>, vector<4x16x32xf32>
    %1 = vector.shape_cast %0 : vector<4x16x32xf32> to vector<64x32xf32>
    %cst = arith.constant dense<0.000000e+00> : vector<64xf32>
    %2 = vector.multi_reduction <add>, %1, %cst [1] : vector<64x32xf32> to vector<64xf32>
    %3 = vector.shape_cast %2 : vector<64xf32> to vector<64x1xf32>
    %cst_2 = arith.constant 3.200000e+01 : f32
    %4 = vector.broadcast %cst_2 : f32 to vector<64x1xf32>
    %5 = arith.divf %3, %4 : vector<64x1xf32>
    %6 = vector.broadcast %5 : vector<64x1xf32> to vector<64x32xf32>
    %7 = arith.subf %1, %6 : vector<64x32xf32>
    %8 = arith.mulf %7, %7 : vector<64x32xf32>
    %cst_3 = arith.constant dense<0.000000e+00> : vector<64xf32>
    %9 = vector.multi_reduction <add>, %8, %cst_3 [1] : vector<64x32xf32> to vector<64xf32>
    %10 = vector.shape_cast %9 : vector<64xf32> to vector<64x1xf32>
    %cst_4 = arith.constant 3.200000e+01 : f32
    %11 = vector.broadcast %cst_4 : f32 to vector<64x1xf32>
    %12 = arith.divf %10, %11 : vector<64x1xf32>
    %13 = vector.broadcast %5 : vector<64x1xf32> to vector<64x32xf32>
    %14 = arith.subf %1, %13 : vector<64x32xf32>
    %cst_5 = arith.constant 9.99999974E-6 : f32
    %15 = vector.broadcast %cst_5 : f32 to vector<64x1xf32>
    %16 = arith.addf %12, %15 : vector<64x1xf32>
    %17 = math.rsqrt %16 : vector<64x1xf32>
    %18 = vector.broadcast %17 : vector<64x1xf32> to vector<64x32xf32>
    %19 = arith.mulf %14, %18 : vector<64x32xf32>
    %20 = arith.truncf %19 : vector<64x32xf32> to vector<64x32xbf16>
    %c0_6 = arith.constant 0 : index
    %c0_7 = arith.constant 0 : index
    %21 = vector.load %arg2[%c0_6, %c0_7] : memref<32x128xbf16, #tpu.memory_space<vmem>>, vector<32x128xbf16>
    %cst_8 = arith.constant dense<0.000000e+00> : vector<64x128xf32>
    %22 = tpu.matmul %20, %21, %cst_8 {dimension_numbers = #tpu.dot_dimension_numbers<[1], [0], [0], [1], [0, 0, 1, 1], [], []>} : vector<64x32xbf16>, vector<32x128xbf16>, vector<64x128xf32> -> vector<64x128xf32>
    %c0_9 = arith.constant 0 : index
    %c0_10 = arith.constant 0 : index
    %23 = vector.load %arg3[%c0_9, %c0_10] : memref<1x128xf32, #tpu.memory_space<vmem>>, vector<1x128xf32>
    %24 = vector.broadcast %23 : vector<1x128xf32> to vector<64x128xf32>
    %25 = arith.addf %22, %24 : vector<64x128xf32>
    %26 = vector.extract_strided_slice %25 {offsets = [0, 0], sizes = [64, 64], strides = [1, 1]} : vector<64x128xf32> to vector<64x64xf32>
    %27 = vector.extract_strided_slice %25 {offsets = [0, 64], sizes = [64, 64], strides = [1, 1]} : vector<64x128xf32> to vector<64x64xf32>
    %28 = arith.negf %27 : vector<64x64xf32>
    %29 = math.exp %28 : vector<64x64xf32>
    %cst_11 = arith.constant 1.000000e+00 : f32
    %30 = vector.broadcast %cst_11 : f32 to vector<64x64xf32>
    %31 = arith.addf %30, %29 : vector<64x64xf32>
    %32 = arith.divf %30, %31 : vector<64x64xf32>
    %33 = arith.mulf %26, %32 : vector<64x64xf32>
    %34 = vector.shape_cast %33 : vector<64x64xf32> to vector<2x2x16x64xf32>
    %35 = vector.extract_strided_slice %34 {offsets = [0, 0, 0, 0], sizes = [2, 1, 16, 64], strides = [1, 1, 1, 1]} : vector<2x2x16x64xf32> to vector<2x1x16x64xf32>
    %36 = vector.shape_cast %35 : vector<2x1x16x64xf32> to vector<2x16x64xf32>
    %37 = vector.extract_strided_slice %34 {offsets = [0, 1, 0, 0], sizes = [2, 1, 16, 64], strides = [1, 1, 1, 1]} : vector<2x2x16x64xf32> to vector<2x1x16x64xf32>
    %38 = vector.shape_cast %37 : vector<2x1x16x64xf32> to vector<2x16x64xf32>
    %39 = tpu.concatenate %36, %38 in 2 : vector<2x16x64xf32>, vector<2x16x64xf32> -> vector<2x16x128xf32>
    %cst_12 = arith.constant 0.000000e+00 : f32
    %40 = vector.broadcast %cst_12 : f32 to vector<2x16x128xf32>
    %c0_13 = arith.constant 0 : index
    %c0_14 = arith.constant 0 : index
    %c0_15 = arith.constant 0 : index
    %41 = vector.load %arg9[%c0_13, %c0_14, %c0_15] : memref<2x48x128xf32, #tpu.memory_space<vmem>>, vector<2x16x128xf32>
    tpu.vector_store %arg9[%c0_13, %c0_14, %c0_15], %40 {strides = array<i32>} : memref<2x48x128xf32, #tpu.memory_space<vmem>>, vector<2x16x128xf32>,
    %c0_16 = arith.constant 0 : index
    %c32 = arith.constant 32 : index
    %c0_17 = arith.constant 0 : index
    %42 = vector.load %arg9[%c0_16, %c32, %c0_17] : memref<2x48x128xf32, #tpu.memory_space<vmem>>, vector<2x16x128xf32>
    tpu.vector_store %arg9[%c0_16, %c32, %c0_17], %40 {strides = array<i32>} : memref<2x48x128xf32, #tpu.memory_space<vmem>>, vector<2x16x128xf32>,
    %c0_18 = arith.constant 0 : index
    %c16 = arith.constant 16 : index
    %c0_19 = arith.constant 0 : index
    %43 = vector.load %arg9[%c0_18, %c16, %c0_19] : memref<2x48x128xf32, #tpu.memory_space<vmem>>, vector<2x16x128xf32>
    tpu.vector_store %arg9[%c0_18, %c16, %c0_19], %39 {strides = array<i32>} : memref<2x48x128xf32, #tpu.memory_space<vmem>>, vector<2x16x128xf32>,
    %c0_i32 = arith.constant 0 : i32
    %c2_i32 = arith.constant 2 : i32
    %44 = arith.addi %c0_i32, %c2_i32 : i32
    %c1_i32 = arith.constant 1 : i32
    scf.for %arg10 = %c0_i32 to %44 step %c1_i32  : i32 {
      %45 = arith.index_cast %arg10 : i32 to index
      %c1 = arith.constant 1 : index
      %c0_21 = arith.constant 0 : index
      %46 = vector.load %arg9[%45, %c1, %c0_21] : memref<2x48x128xf32, #tpu.memory_space<vmem>>, vector<1x16x128xf32>
      %47 = vector.shape_cast %46 : vector<1x16x128xf32> to vector<16x128xf32>
      %c0_22 = arith.constant 0 : index
      %c0_23 = arith.constant 0 : index
      %48 = vector.load %arg4[%c0_22, %c0_23] : memref<31x128xf32, #tpu.memory_space<vmem>>, vector<1x128xf32>
      %49 = vector.broadcast %48 : vector<1x128xf32> to vector<16x128xf32>
      %50 = arith.mulf %47, %49 : vector<16x128xf32>
      %51 = arith.index_cast %arg10 : i32 to index
      %c2 = arith.constant 2 : index
      %c0_24 = arith.constant 0 : index
      %52 = vector.load %arg9[%51, %c2, %c0_24] : memref<2x48x128xf32, #tpu.memory_space<vmem>>, vector<1x16x128xf32>
      %53 = vector.shape_cast %52 : vector<1x16x128xf32> to vector<16x128xf32>
      %c1_25 = arith.constant 1 : index
      %c0_26 = arith.constant 0 : index
      %54 = vector.load %arg4[%c1_25, %c0_26] : memref<31x128xf32, #tpu.memory_space<vmem>>, vector<1x128xf32>
      %55 = vector.broadcast %54 : vector<1x128xf32> to vector<16x128xf32>
      %56 = arith.mulf %53, %55 : vector<16x128xf32>
      %57 = arith.addf %50, %56 : vector<16x128xf32>
      %58 = arith.index_cast %arg10 : i32 to index
      %c3 = arith.constant 3 : index
      %c0_27 = arith.constant 0 : index
      %59 = vector.load %arg9[%58, %c3, %c0_27] : memref<2x48x128xf32, #tpu.memory_space<vmem>>, vector<1x16x128xf32>
      %60 = vector.shape_cast %59 : vector<1x16x128xf32> to vector<16x128xf32>
      %c2_28 = arith.constant 2 : index
      %c0_29 = arith.constant 0 : index
      %61 = vector.load %arg4[%c2_28, %c0_29] : memref<31x128xf32, #tpu.memory_space<vmem>>, vector<1x128xf32>
      %62 = vector.broadcast %61 : vector<1x128xf32> to vector<16x128xf32>
      %63 = arith.mulf %60, %62 : vector<16x128xf32>
      %64 = arith.addf %57, %63 : vector<16x128xf32>
      %65 = arith.index_cast %arg10 : i32 to index
      %c4 = arith.constant 4 : index
      %c0_30 = arith.constant 0 : index
      %66 = vector.load %arg9[%65, %c4, %c0_30] : memref<2x48x128xf32, #tpu.memory_space<vmem>>, vector<1x16x128xf32>
      %67 = vector.shape_cast %66 : vector<1x16x128xf32> to vector<16x128xf32>
      %c3_31 = arith.constant 3 : index
      %c0_32 = arith.constant 0 : index
      %68 = vector.load %arg4[%c3_31, %c0_32] : memref<31x128xf32, #tpu.memory_space<vmem>>, vector<1x128xf32>
      %69 = vector.broadcast %68 : vector<1x128xf32> to vector<16x128xf32>
      %70 = arith.mulf %67, %69 : vector<16x128xf32>
      %71 = arith.addf %64, %70 : vector<16x128xf32>
      %72 = arith.index_cast %arg10 : i32 to index
      %c5 = arith.constant 5 : index
      %c0_33 = arith.constant 0 : index
      %73 = vector.load %arg9[%72, %c5, %c0_33] : memref<2x48x128xf32, #tpu.memory_space<vmem>>, vector<1x16x128xf32>
      %74 = vector.shape_cast %73 : vector<1x16x128xf32> to vector<16x128xf32>
      %c4_34 = arith.constant 4 : index
      %c0_35 = arith.constant 0 : index
      %75 = vector.load %arg4[%c4_34, %c0_35] : memref<31x128xf32, #tpu.memory_space<vmem>>, vector<1x128xf32>
      %76 = vector.broadcast %75 : vector<1x128xf32> to vector<16x128xf32>
      %77 = arith.mulf %74, %76 : vector<16x128xf32>
      %78 = arith.addf %71, %77 : vector<16x128xf32>
      %79 = arith.index_cast %arg10 : i32 to index
      %c6 = arith.constant 6 : index
      %c0_36 = arith.constant 0 : index
      %80 = vector.load %arg9[%79, %c6, %c0_36] : memref<2x48x128xf32, #tpu.memory_space<vmem>>, vector<1x16x128xf32>
      %81 = vector.shape_cast %80 : vector<1x16x128xf32> to vector<16x128xf32>
      %c5_37 = arith.constant 5 : index
      %c0_38 = arith.constant 0 : index
      %82 = vector.load %arg4[%c5_37, %c0_38] : memref<31x128xf32, #tpu.memory_space<vmem>>, vector<1x128xf32>
      %83 = vector.broadcast %82 : vector<1x128xf32> to vector<16x128xf32>
      %84 = arith.mulf %81, %83 : vector<16x128xf32>
      %85 = arith.addf %78, %84 : vector<16x128xf32>
      %86 = arith.index_cast %arg10 : i32 to index
      %c7 = arith.constant 7 : index
      %c0_39 = arith.constant 0 : index
      %87 = vector.load %arg9[%86, %c7, %c0_39] : memref<2x48x128xf32, #tpu.memory_space<vmem>>, vector<1x16x128xf32>
      %88 = vector.shape_cast %87 : vector<1x16x128xf32> to vector<16x128xf32>
      %c6_40 = arith.constant 6 : index
      %c0_41 = arith.constant 0 : index
      %89 = vector.load %arg4[%c6_40, %c0_41] : memref<31x128xf32, #tpu.memory_space<vmem>>, vector<1x128xf32>
      %90 = vector.broadcast %89 : vector<1x128xf32> to vector<16x128xf32>
      %91 = arith.mulf %88, %90 : vector<16x128xf32>
      %92 = arith.addf %85, %91 : vector<16x128xf32>
      %93 = arith.index_cast %arg10 : i32 to index
      %c8 = arith.constant 8 : index
      %c0_42 = arith.constant 0 : index
      %94 = vector.load %arg9[%93, %c8, %c0_42] : memref<2x48x128xf32, #tpu.memory_space<vmem>>, vector<1x16x128xf32>
      %95 = vector.shape_cast %94 : vector<1x16x128xf32> to vector<16x128xf32>
      %c7_43 = arith.constant 7 : index
      %c0_44 = arith.constant 0 : index
      %96 = vector.load %arg4[%c7_43, %c0_44] : memref<31x128xf32, #tpu.memory_space<vmem>>, vector<1x128xf32>
      %97 = vector.broadcast %96 : vector<1x128xf32> to vector<16x128xf32>
      %98 = arith.mulf %95, %97 : vector<16x128xf32>
      %99 = arith.addf %92, %98 : vector<16x128xf32>
      %100 = arith.index_cast %arg10 : i32 to index
      %c9 = arith.constant 9 : index
      %c0_45 = arith.constant 0 : index
      %101 = vector.load %arg9[%100, %c9, %c0_45] : memref<2x48x128xf32, #tpu.memory_space<vmem>>, vector<1x16x128xf32>
      %102 = vector.shape_cast %101 : vector<1x16x128xf32> to vector<16x128xf32>
      %c8_46 = arith.constant 8 : index
      %c0_47 = arith.constant 0 : index
      %103 = vector.load %arg4[%c8_46, %c0_47] : memref<31x128xf32, #tpu.memory_space<vmem>>, vector<1x128xf32>
      %104 = vector.broadcast %103 : vector<1x128xf32> to vector<16x128xf32>
      %105 = arith.mulf %102, %104 : vector<16x128xf32>
      %106 = arith.addf %99, %105 : vector<16x128xf32>
      %107 = arith.index_cast %arg10 : i32 to index
      %c10 = arith.constant 10 : index
      %c0_48 = arith.constant 0 : index
      %108 = vector.load %arg9[%107, %c10, %c0_48] : memref<2x48x128xf32, #tpu.memory_space<vmem>>, vector<1x16x128xf32>
      %109 = vector.shape_cast %108 : vector<1x16x128xf32> to vector<16x128xf32>
      %c9_49 = arith.constant 9 : index
      %c0_50 = arith.constant 0 : index
      %110 = vector.load %arg4[%c9_49, %c0_50] : memref<31x128xf32, #tpu.memory_space<vmem>>, vector<1x128xf32>
      %111 = vector.broadcast %110 : vector<1x128xf32> to vector<16x128xf32>
      %112 = arith.mulf %109, %111 : vector<16x128xf32>
      %113 = arith.addf %106, %112 : vector<16x128xf32>
      %114 = arith.index_cast %arg10 : i32 to index
      %c11 = arith.constant 11 : index
      %c0_51 = arith.constant 0 : index
      %115 = vector.load %arg9[%114, %c11, %c0_51] : memref<2x48x128xf32, #tpu.memory_space<vmem>>, vector<1x16x128xf32>
      %116 = vector.shape_cast %115 : vector<1x16x128xf32> to vector<16x128xf32>
      %c10_52 = arith.constant 10 : index
      %c0_53 = arith.constant 0 : index
      %117 = vector.load %arg4[%c10_52, %c0_53] : memref<31x128xf32, #tpu.memory_space<vmem>>, vector<1x128xf32>
      %118 = vector.broadcast %117 : vector<1x128xf32> to vector<16x128xf32>
      %119 = arith.mulf %116, %118 : vector<16x128xf32>
      %120 = arith.addf %113, %119 : vector<16x128xf32>
      %121 = arith.index_cast %arg10 : i32 to index
      %c12 = arith.constant 12 : index
      %c0_54 = arith.constant 0 : index
      %122 = vector.load %arg9[%121, %c12, %c0_54] : memref<2x48x128xf32, #tpu.memory_space<vmem>>, vector<1x16x128xf32>
      %123 = vector.shape_cast %122 : vector<1x16x128xf32> to vector<16x128xf32>
      %c11_55 = arith.constant 11 : index
      %c0_56 = arith.constant 0 : index
      %124 = vector.load %arg4[%c11_55, %c0_56] : memref<31x128xf32, #tpu.memory_space<vmem>>, vector<1x128xf32>
      %125 = vector.broadcast %124 : vector<1x128xf32> to vector<16x128xf32>
      %126 = arith.mulf %123, %125 : vector<16x128xf32>
      %127 = arith.addf %120, %126 : vector<16x128xf32>
      %128 = arith.index_cast %arg10 : i32 to index
      %c13 = arith.constant 13 : index
      %c0_57 = arith.constant 0 : index
      %129 = vector.load %arg9[%128, %c13, %c0_57] : memref<2x48x128xf32, #tpu.memory_space<vmem>>, vector<1x16x128xf32>
      %130 = vector.shape_cast %129 : vector<1x16x128xf32> to vector<16x128xf32>
      %c12_58 = arith.constant 12 : index
      %c0_59 = arith.constant 0 : index
      %131 = vector.load %arg4[%c12_58, %c0_59] : memref<31x128xf32, #tpu.memory_space<vmem>>, vector<1x128xf32>
      %132 = vector.broadcast %131 : vector<1x128xf32> to vector<16x128xf32>
      %133 = arith.mulf %130, %132 : vector<16x128xf32>
      %134 = arith.addf %127, %133 : vector<16x128xf32>
      %135 = arith.index_cast %arg10 : i32 to index
      %c14 = arith.constant 14 : index
      %c0_60 = arith.constant 0 : index
      %136 = vector.load %arg9[%135, %c14, %c0_60] : memref<2x48x128xf32, #tpu.memory_space<vmem>>, vector<1x16x128xf32>
      %137 = vector.shape_cast %136 : vector<1x16x128xf32> to vector<16x128xf32>
      %c13_61 = arith.constant 13 : index
      %c0_62 = arith.constant 0 : index
      %138 = vector.load %arg4[%c13_61, %c0_62] : memref<31x128xf32, #tpu.memory_space<vmem>>, vector<1x128xf32>
      %139 = vector.broadcast %138 : vector<1x128xf32> to vector<16x128xf32>
      %140 = arith.mulf %137, %139 : vector<16x128xf32>
      %141 = arith.addf %134, %140 : vector<16x128xf32>
      %142 = arith.index_cast %arg10 : i32 to index
      %c15 = arith.constant 15 : index
      %c0_63 = arith.constant 0 : index
      %143 = vector.load %arg9[%142, %c15, %c0_63] : memref<2x48x128xf32, #tpu.memory_space<vmem>>, vector<1x16x128xf32>
      %144 = vector.shape_cast %143 : vector<1x16x128xf32> to vector<16x128xf32>
      %c14_64 = arith.constant 14 : index
      %c0_65 = arith.constant 0 : index
      %145 = vector.load %arg4[%c14_64, %c0_65] : memref<31x128xf32, #tpu.memory_space<vmem>>, vector<1x128xf32>
      %146 = vector.broadcast %145 : vector<1x128xf32> to vector<16x128xf32>
      %147 = arith.mulf %144, %146 : vector<16x128xf32>
      %148 = arith.addf %141, %147 : vector<16x128xf32>
      %149 = arith.index_cast %arg10 : i32 to index
      %c16_66 = arith.constant 16 : index
      %c0_67 = arith.constant 0 : index
      %150 = vector.load %arg9[%149, %c16_66, %c0_67] : memref<2x48x128xf32, #tpu.memory_space<vmem>>, vector<1x16x128xf32>
      %151 = vector.shape_cast %150 : vector<1x16x128xf32> to vector<16x128xf32>
      %c15_68 = arith.constant 15 : index
      %c0_69 = arith.constant 0 : index
      %152 = vector.load %arg4[%c15_68, %c0_69] : memref<31x128xf32, #tpu.memory_space<vmem>>, vector<1x128xf32>
      %153 = vector.broadcast %152 : vector<1x128xf32> to vector<16x128xf32>
      %154 = arith.mulf %151, %153 : vector<16x128xf32>
      %155 = arith.addf %148, %154 : vector<16x128xf32>
      %156 = arith.index_cast %arg10 : i32 to index
      %c17 = arith.constant 17 : index
      %c0_70 = arith.constant 0 : index
      %157 = vector.load %arg9[%156, %c17, %c0_70] : memref<2x48x128xf32, #tpu.memory_space<vmem>>, vector<1x16x128xf32>
      %158 = vector.shape_cast %157 : vector<1x16x128xf32> to vector<16x128xf32>
      %c16_71 = arith.constant 16 : index
      %c0_72 = arith.constant 0 : index
      %159 = vector.load %arg4[%c16_71, %c0_72] : memref<31x128xf32, #tpu.memory_space<vmem>>, vector<1x128xf32>
      %160 = vector.broadcast %159 : vector<1x128xf32> to vector<16x128xf32>
      %161 = arith.mulf %158, %160 : vector<16x128xf32>
      %162 = arith.addf %155, %161 : vector<16x128xf32>
      %163 = arith.index_cast %arg10 : i32 to index
      %c18 = arith.constant 18 : index
      %c0_73 = arith.constant 0 : index
      %164 = vector.load %arg9[%163, %c18, %c0_73] : memref<2x48x128xf32, #tpu.memory_space<vmem>>, vector<1x16x128xf32>
      %165 = vector.shape_cast %164 : vector<1x16x128xf32> to vector<16x128xf32>
      %c17_74 = arith.constant 17 : index
      %c0_75 = arith.constant 0 : index
      %166 = vector.load %arg4[%c17_74, %c0_75] : memref<31x128xf32, #tpu.memory_space<vmem>>, vector<1x128xf32>
      %167 = vector.broadcast %166 : vector<1x128xf32> to vector<16x128xf32>
      %168 = arith.mulf %165, %167 : vector<16x128xf32>
      %169 = arith.addf %162, %168 : vector<16x128xf32>
      %170 = arith.index_cast %arg10 : i32 to index
      %c19 = arith.constant 19 : index
      %c0_76 = arith.constant 0 : index
      %171 = vector.load %arg9[%170, %c19, %c0_76] : memref<2x48x128xf32, #tpu.memory_space<vmem>>, vector<1x16x128xf32>
      %172 = vector.shape_cast %171 : vector<1x16x128xf32> to vector<16x128xf32>
      %c18_77 = arith.constant 18 : index
      %c0_78 = arith.constant 0 : index
      %173 = vector.load %arg4[%c18_77, %c0_78] : memref<31x128xf32, #tpu.memory_space<vmem>>, vector<1x128xf32>
      %174 = vector.broadcast %173 : vector<1x128xf32> to vector<16x128xf32>
      %175 = arith.mulf %172, %174 : vector<16x128xf32>
      %176 = arith.addf %169, %175 : vector<16x128xf32>
      %177 = arith.index_cast %arg10 : i32 to index
      %c20 = arith.constant 20 : index
      %c0_79 = arith.constant 0 : index
      %178 = vector.load %arg9[%177, %c20, %c0_79] : memref<2x48x128xf32, #tpu.memory_space<vmem>>, vector<1x16x128xf32>
      %179 = vector.shape_cast %178 : vector<1x16x128xf32> to vector<16x128xf32>
      %c19_80 = arith.constant 19 : index
      %c0_81 = arith.constant 0 : index
      %180 = vector.load %arg4[%c19_80, %c0_81] : memref<31x128xf32, #tpu.memory_space<vmem>>, vector<1x128xf32>
      %181 = vector.broadcast %180 : vector<1x128xf32> to vector<16x128xf32>
      %182 = arith.mulf %179, %181 : vector<16x128xf32>
      %183 = arith.addf %176, %182 : vector<16x128xf32>
      %184 = arith.index_cast %arg10 : i32 to index
      %c21 = arith.constant 21 : index
      %c0_82 = arith.constant 0 : index
      %185 = vector.load %arg9[%184, %c21, %c0_82] : memref<2x48x128xf32, #tpu.memory_space<vmem>>, vector<1x16x128xf32>
      %186 = vector.shape_cast %185 : vector<1x16x128xf32> to vector<16x128xf32>
      %c20_83 = arith.constant 20 : index
      %c0_84 = arith.constant 0 : index
      %187 = vector.load %arg4[%c20_83, %c0_84] : memref<31x128xf32, #tpu.memory_space<vmem>>, vector<1x128xf32>
      %188 = vector.broadcast %187 : vector<1x128xf32> to vector<16x128xf32>
      %189 = arith.mulf %186, %188 : vector<16x128xf32>
      %190 = arith.addf %183, %189 : vector<16x128xf32>
      %191 = arith.index_cast %arg10 : i32 to index
      %c22 = arith.constant 22 : index
      %c0_85 = arith.constant 0 : index
      %192 = vector.load %arg9[%191, %c22, %c0_85] : memref<2x48x128xf32, #tpu.memory_space<vmem>>, vector<1x16x128xf32>
      %193 = vector.shape_cast %192 : vector<1x16x128xf32> to vector<16x128xf32>
      %c21_86 = arith.constant 21 : index
      %c0_87 = arith.constant 0 : index
      %194 = vector.load %arg4[%c21_86, %c0_87] : memref<31x128xf32, #tpu.memory_space<vmem>>, vector<1x128xf32>
      %195 = vector.broadcast %194 : vector<1x128xf32> to vector<16x128xf32>
      %196 = arith.mulf %193, %195 : vector<16x128xf32>
      %197 = arith.addf %190, %196 : vector<16x128xf32>
      %198 = arith.index_cast %arg10 : i32 to index
      %c23 = arith.constant 23 : index
      %c0_88 = arith.constant 0 : index
      %199 = vector.load %arg9[%198, %c23, %c0_88] : memref<2x48x128xf32, #tpu.memory_space<vmem>>, vector<1x16x128xf32>
      %200 = vector.shape_cast %199 : vector<1x16x128xf32> to vector<16x128xf32>
      %c22_89 = arith.constant 22 : index
      %c0_90 = arith.constant 0 : index
      %201 = vector.load %arg4[%c22_89, %c0_90] : memref<31x128xf32, #tpu.memory_space<vmem>>, vector<1x128xf32>
      %202 = vector.broadcast %201 : vector<1x128xf32> to vector<16x128xf32>
      %203 = arith.mulf %200, %202 : vector<16x128xf32>
      %204 = arith.addf %197, %203 : vector<16x128xf32>
      %205 = arith.index_cast %arg10 : i32 to index
      %c24 = arith.constant 24 : index
      %c0_91 = arith.constant 0 : index
      %206 = vector.load %arg9[%205, %c24, %c0_91] : memref<2x48x128xf32, #tpu.memory_space<vmem>>, vector<1x16x128xf32>
      %207 = vector.shape_cast %206 : vector<1x16x128xf32> to vector<16x128xf32>
      %c23_92 = arith.constant 23 : index
      %c0_93 = arith.constant 0 : index
      %208 = vector.load %arg4[%c23_92, %c0_93] : memref<31x128xf32, #tpu.memory_space<vmem>>, vector<1x128xf32>
      %209 = vector.broadcast %208 : vector<1x128xf32> to vector<16x128xf32>
      %210 = arith.mulf %207, %209 : vector<16x128xf32>
      %211 = arith.addf %204, %210 : vector<16x128xf32>
      %212 = arith.index_cast %arg10 : i32 to index
      %c25 = arith.constant 25 : index
      %c0_94 = arith.constant 0 : index
      %213 = vector.load %arg9[%212, %c25, %c0_94] : memref<2x48x128xf32, #tpu.memory_space<vmem>>, vector<1x16x128xf32>
      %214 = vector.shape_cast %213 : vector<1x16x128xf32> to vector<16x128xf32>
      %c24_95 = arith.constant 24 : index
      %c0_96 = arith.constant 0 : index
      %215 = vector.load %arg4[%c24_95, %c0_96] : memref<31x128xf32, #tpu.memory_space<vmem>>, vector<1x128xf32>
      %216 = vector.broadcast %215 : vector<1x128xf32> to vector<16x128xf32>
      %217 = arith.mulf %214, %216 : vector<16x128xf32>
      %218 = arith.addf %211, %217 : vector<16x128xf32>
      %219 = arith.index_cast %arg10 : i32 to index
      %c26 = arith.constant 26 : index
      %c0_97 = arith.constant 0 : index
      %220 = vector.load %arg9[%219, %c26, %c0_97] : memref<2x48x128xf32, #tpu.memory_space<vmem>>, vector<1x16x128xf32>
      %221 = vector.shape_cast %220 : vector<1x16x128xf32> to vector<16x128xf32>
      %c25_98 = arith.constant 25 : index
      %c0_99 = arith.constant 0 : index
      %222 = vector.load %arg4[%c25_98, %c0_99] : memref<31x128xf32, #tpu.memory_space<vmem>>, vector<1x128xf32>
      %223 = vector.broadcast %222 : vector<1x128xf32> to vector<16x128xf32>
      %224 = arith.mulf %221, %223 : vector<16x128xf32>
      %225 = arith.addf %218, %224 : vector<16x128xf32>
      %226 = arith.index_cast %arg10 : i32 to index
      %c27 = arith.constant 27 : index
      %c0_100 = arith.constant 0 : index
      %227 = vector.load %arg9[%226, %c27, %c0_100] : memref<2x48x128xf32, #tpu.memory_space<vmem>>, vector<1x16x128xf32>
      %228 = vector.shape_cast %227 : vector<1x16x128xf32> to vector<16x128xf32>
      %c26_101 = arith.constant 26 : index
      %c0_102 = arith.constant 0 : index
      %229 = vector.load %arg4[%c26_101, %c0_102] : memref<31x128xf32, #tpu.memory_space<vmem>>, vector<1x128xf32>
      %230 = vector.broadcast %229 : vector<1x128xf32> to vector<16x128xf32>
      %231 = arith.mulf %228, %230 : vector<16x128xf32>
      %232 = arith.addf %225, %231 : vector<16x128xf32>
      %233 = arith.index_cast %arg10 : i32 to index
      %c28 = arith.constant 28 : index
      %c0_103 = arith.constant 0 : index
      %234 = vector.load %arg9[%233, %c28, %c0_103] : memref<2x48x128xf32, #tpu.memory_space<vmem>>, vector<1x16x128xf32>
      %235 = vector.shape_cast %234 : vector<1x16x128xf32> to vector<16x128xf32>
      %c27_104 = arith.constant 27 : index
      %c0_105 = arith.constant 0 : index
      %236 = vector.load %arg4[%c27_104, %c0_105] : memref<31x128xf32, #tpu.memory_space<vmem>>, vector<1x128xf32>
      %237 = vector.broadcast %236 : vector<1x128xf32> to vector<16x128xf32>
      %238 = arith.mulf %235, %237 : vector<16x128xf32>
      %239 = arith.addf %232, %238 : vector<16x128xf32>
      %240 = arith.index_cast %arg10 : i32 to index
      %c29 = arith.constant 29 : index
      %c0_106 = arith.constant 0 : index
      %241 = vector.load %arg9[%240, %c29, %c0_106] : memref<2x48x128xf32, #tpu.memory_space<vmem>>, vector<1x16x128xf32>
      %242 = vector.shape_cast %241 : vector<1x16x128xf32> to vector<16x128xf32>
      %c28_107 = arith.constant 28 : index
      %c0_108 = arith.constant 0 : index
      %243 = vector.load %arg4[%c28_107, %c0_108] : memref<31x128xf32, #tpu.memory_space<vmem>>, vector<1x128xf32>
      %244 = vector.broadcast %243 : vector<1x128xf32> to vector<16x128xf32>
      %245 = arith.mulf %242, %244 : vector<16x128xf32>
      %246 = arith.addf %239, %245 : vector<16x128xf32>
      %247 = arith.index_cast %arg10 : i32 to index
      %c30 = arith.constant 30 : index
      %c0_109 = arith.constant 0 : index
      %248 = vector.load %arg9[%247, %c30, %c0_109] : memref<2x48x128xf32, #tpu.memory_space<vmem>>, vector<1x16x128xf32>
      %249 = vector.shape_cast %248 : vector<1x16x128xf32> to vector<16x128xf32>
      %c29_110 = arith.constant 29 : index
      %c0_111 = arith.constant 0 : index
      %250 = vector.load %arg4[%c29_110, %c0_111] : memref<31x128xf32, #tpu.memory_space<vmem>>, vector<1x128xf32>
      %251 = vector.broadcast %250 : vector<1x128xf32> to vector<16x128xf32>
      %252 = arith.mulf %249, %251 : vector<16x128xf32>
      %253 = arith.addf %246, %252 : vector<16x128xf32>
      %254 = arith.index_cast %arg10 : i32 to index
      %c31 = arith.constant 31 : index
      %c0_112 = arith.constant 0 : index
      %255 = vector.load %arg9[%254, %c31, %c0_112] : memref<2x48x128xf32, #tpu.memory_space<vmem>>, vector<1x16x128xf32>
      %256 = vector.shape_cast %255 : vector<1x16x128xf32> to vector<16x128xf32>
      %c30_113 = arith.constant 30 : index
      %c0_114 = arith.constant 0 : index
      %257 = vector.load %arg4[%c30_113, %c0_114] : memref<31x128xf32, #tpu.memory_space<vmem>>, vector<1x128xf32>
      %258 = vector.broadcast %257 : vector<1x128xf32> to vector<16x128xf32>
      %259 = arith.mulf %256, %258 : vector<16x128xf32>
      %260 = arith.addf %253, %259 : vector<16x128xf32>
      %c0_115 = arith.constant 0 : index
      %c0_116 = arith.constant 0 : index
      %261 = vector.load %arg5[%c0_115, %c0_116] : memref<1x128xf32, #tpu.memory_space<vmem>>, vector<1x128xf32>
      %262 = vector.broadcast %261 : vector<1x128xf32> to vector<16x128xf32>
      %263 = arith.addf %260, %262 : vector<16x128xf32>
      %264 = arith.negf %263 : vector<16x128xf32>
      %265 = math.exp %264 : vector<16x128xf32>
      %cst_117 = arith.constant 1.000000e+00 : f32
      %266 = vector.broadcast %cst_117 : f32 to vector<16x128xf32>
      %267 = arith.addf %266, %265 : vector<16x128xf32>
      %268 = arith.divf %266, %267 : vector<16x128xf32>
      %269 = arith.mulf %263, %268 : vector<16x128xf32>
      %270 = arith.truncf %269 : vector<16x128xf32> to vector<16x128xbf16>
      %c0_118 = arith.constant 0 : index
      %c0_119 = arith.constant 0 : index
      %271 = vector.load %arg6[%c0_118, %c0_119] : memref<128x64xbf16, #tpu.memory_space<vmem>>, vector<128x64xbf16>
      %cst_120 = arith.constant dense<0.000000e+00> : vector<16x64xf32>
      %272 = tpu.matmul %270, %271, %cst_120 {dimension_numbers = #tpu.dot_dimension_numbers<[1], [0], [0], [1], [0, 0, 1, 1], [], []>} : vector<16x128xbf16>, vector<128x64xbf16>, vector<16x64xf32> -> vector<16x64xf32>
      %c0_121 = arith.constant 0 : index
      %c0_122 = arith.constant 0 : index
      %273 = vector.load %arg7[%c0_121, %c0_122] : memref<1x64xf32, #tpu.memory_space<vmem>>, vector<1x64xf32>
      %274 = vector.broadcast %273 : vector<1x64xf32> to vector<16x64xf32>
      %275 = arith.addf %272, %274 : vector<16x64xf32>
      %276 = arith.index_cast %arg10 : i32 to index
      %c0_123 = arith.constant 0 : index
      %c0_124 = arith.constant 0 : index
      %277 = vector.load %arg8[%276, %c0_123, %c0_124] : memref<2x16x64xf32, #tpu.memory_space<vmem>>, vector<1x16x64xf32>
      %278 = vector.shape_cast %277 : vector<1x16x64xf32> to vector<16x64xf32>
      %279 = vector.shape_cast %275 : vector<16x64xf32> to vector<1x16x64xf32>
      tpu.vector_store %arg8[%276, %c0_123, %c0_124], %279 {strides = array<i32>} : memref<2x16x64xf32, #tpu.memory_space<vmem>>, vector<1x16x64xf32>,
    }
    %c2_i32_20 = arith.constant 2 : i32
    return
  }
  func.func @transform_0(%arg0: i32) -> (i32, i32, i32) {
    %c0_i32 = arith.constant 0 : i32
    %c0_i32_0 = arith.constant 0 : i32
    %c0_i32_1 = arith.constant 0 : i32
    return %arg0, %c0_i32, %c0_i32_0 : i32, i32, i32
  }
  func.func @transform_1(%arg0: i32) -> (i32, i32) {
    %c0_i32 = arith.constant 0 : i32
    %c0_i32_0 = arith.constant 0 : i32
    %c0_i32_1 = arith.constant 0 : i32
    return %c0_i32, %c0_i32_0 : i32, i32
  }
  func.func @transform_2(%arg0: i32) -> (i32, i32) {
    %c0_i32 = arith.constant 0 : i32
    %c0_i32_0 = arith.constant 0 : i32
    %c0_i32_1 = arith.constant 0 : i32
    return %c0_i32, %c0_i32_0 : i32, i32
  }
  func.func @transform_3(%arg0: i32) -> (i32, i32) {
    %c0_i32 = arith.constant 0 : i32
    %c0_i32_0 = arith.constant 0 : i32
    %c0_i32_1 = arith.constant 0 : i32
    return %c0_i32, %c0_i32_0 : i32, i32
  }
  func.func @transform_4(%arg0: i32) -> (i32, i32) {
    %c0_i32 = arith.constant 0 : i32
    %c0_i32_0 = arith.constant 0 : i32
    %c0_i32_1 = arith.constant 0 : i32
    return %c0_i32, %c0_i32_0 : i32, i32
  }
  func.func @transform_5(%arg0: i32) -> (i32, i32) {
    %c0_i32 = arith.constant 0 : i32
    %c0_i32_0 = arith.constant 0 : i32
    %c0_i32_1 = arith.constant 0 : i32
    return %c0_i32, %c0_i32_0 : i32, i32
  }
  func.func @transform_6(%arg0: i32) -> (i32, i32) {
    %c0_i32 = arith.constant 0 : i32
    %c0_i32_0 = arith.constant 0 : i32
    %c0_i32_1 = arith.constant 0 : i32
    return %c0_i32, %c0_i32_0 : i32, i32
  }
  func.func @transform_7(%arg0: i32) -> (i32, i32, i32) {
    %c0_i32 = arith.constant 0 : i32
    %c0_i32_0 = arith.constant 0 : i32
    %c0_i32_1 = arith.constant 0 : i32
    return %arg0, %c0_i32, %c0_i32_0 : i32, i32, i32
  }
}

</mosaic_0001>

<llo_original>
// kernel: tpu_custom_call.1
$region0: #{tpu_custom_call.1}
  #allocation0 [shape = 'u32[]', space=smem, size = 0x4, offset = 0x4, fixed_abs, tag = 'smem constant byte address 0x4 - core index']
  #allocation1 [shape = 'u32[72,128]{1,0:T(1,128)}', space=vmem, size = 0x9000, scoped, tag = 'internal scratch']
  #allocation2 [shape = 'f32[2,48,128]{2,1,0:T(8,128)}', space=vmem, size = 0xc000, scoped, tag = 'scratch operand']
  %s0 = inlined_call_operand.hbm [shape: f32[8,16,32], index: 0, kind: input, shape index: {}]
  %s1 = inlined_call_operand.vmem [shape: bf16[32,128], index: 1, kind: input, shape index: {}]
  %s2 = inlined_call_operand.vmem [shape: f32[1,128], index: 2, kind: input, shape index: {}]
  %s3 = inlined_call_operand.vmem [shape: f32[31,128], index: 3, kind: input, shape index: {}]
  %s4 = inlined_call_operand.vmem [shape: f32[1,128], index: 4, kind: input, shape index: {}]
  %s5 = inlined_call_operand.vmem [shape: bf16[128,64], index: 5, kind: input, shape index: {}]
  %s6 = inlined_call_operand.vmem [shape: f32[1,64], index: 6, kind: input, shape index: {}]
  %s7 = inlined_call_operand.hbm [shape: f32[4,16,64], index: 7, kind: output, shape index: {}]
  %s8 = sld [smem:[#allocation0]]
  $region72: #{tpu_custom_call.1} parent=0
    _
  %s10 = ssub.s32 1, %s8
  %s11 = scalar_select 0, %s10, %s8
  $region1: #{tpu_custom_call.1} parent=0
    #allocation3 [shape = 'u8[65536]{0}', space=vmem, size = 0x10000, scoped, tag = 'input window, operand 0']
    #allocation4 [shape = 's32[2]{0}', space=sflag, size = 0x8, scoped, tag = 'scoped memory for tpu_custom_call.1']
    #allocation5 [shape = 's32[2]{0}', space=sflag, size = 0x8, scoped, tag = 'scoped memory for tpu_custom_call.1']
    #allocation6 [shape = 'u8[32768]{0}', space=vmem, size = 0x8000, scoped, tag = 'output window, operand 0']
    %12 = vsyncpa [#allocation4], 0
    %s13 = scalar_lea.sflag [#allocation4], 1
    %14 = vsyncpa %s13, 0
    %15 = vsyncpa [#allocation5], 0
    %s16 = scalar_lea.sflag [#allocation5], 1
    %17 = vsyncpa %s16, 0
    loop: start=0, step=1, limit=4
    $region2: #{tpu_custom_call.1} parent=1 // loop_pre_header
      _
    $region3: #{tpu_custom_call.1} parent=1 // loop_header
      %s19 = sphi 0, %s23
      %p20 = scmp.ge.s32.totalorder %s19, 4
      %s29 = sphi 0, %s31
      %s32 = sphi 0, %s29
      %s33 = sphi 0, %s32
      %s49 = sphi 0, %s33
      %s53 = sphi 0, %s53
      %s55 = sphi 0, %s53
      %s56 = sphi 0, %s55
      %s70 = sphi 0, %s56
      %s74 = sphi 0, %s74
      %s76 = sphi 0, %s74
      %s77 = sphi 0, %s76
      %s91 = sphi 0, %s77
      %s95 = sphi 0, %s95
      %s97 = sphi 0, %s95
      %s98 = sphi 0, %s97
      %s112 = sphi 0, %s98
      %s116 = sphi 0, %s116
      %s118 = sphi 0, %s116
      %s119 = sphi 0, %s118
      %s133 = sphi 0, %s119
      %s137 = sphi 0, %s137
      %s139 = sphi 0, %s137
      %s140 = sphi 0, %s139
      %s154 = sphi 0, %s140
      %s158 = sphi 0, %s158
      %s160 = sphi 0, %s158
      %s161 = sphi 0, %s160
      %s175 = sphi 0, %s161
      %s181 = sphi 0, %s183
      %s184 = sphi 0, %s181
      %s185 = sphi 0, %s184
      %s201 = sphi 0, %s185
    $region4: #{tpu_custom_call.1} parent=1 // loop_header_branch
      %22 = sbr.rel (%p20) target = $region8
    $region5: #{tpu_custom_call.1} parent=1 // loop_body
      %s24 = ssub.s32 %s19, 1
      %s25 = ssub.s32 %s19, 2
      %s26 = sadd.s32 %s19, 1
      %s27 = ssub.s32 %s19, %s26
      %p28 = scmp.eq.s32.totalorder %s27, 0
      %s30 = sadd.s32 %s29, 1
      %s31 = scalar_select %p28, %s29, %s30
      %p34 = pneg %p28
      %p35 = scmp.eq.s32.totalorder %s19, 1
      %p36 = por %p34, %p35
      %p37 = scmp.ne.s32.totalorder %s29, %s32
      %p38 = scmp.eq.s32.totalorder %s19, 0
      %p39 = por %p37, %p38
      %p40 = scmp.ne.s32.totalorder %s29, %s32
      %p41 = scmp.eq.s32.totalorder %s24, 1
      %p42 = por %p40, %p41
      %p43 = scmp.ne.s32.totalorder %s32, %s33
      %p44 = scmp.eq.s32.totalorder %s24, 0
      %p45 = por %p43, %p44
      %p46 = scmp.ne.s32.totalorder %s32, %s33
      %p47 = scmp.eq.s32.totalorder %s25, 1
      %p48 = por %p46, %p47
      %p50 = scmp.ne.s32.totalorder %s33, %s49
      %p51 = scmp.eq.s32.totalorder %s25, 0
      %p52 = por %p50, %p51
      %s54 = sadd.s32 %s53, 1
      %p57 = scmp.eq.s32.totalorder %s19, 1
      %p58 = scmp.ne.s32.totalorder %s53, %s55
      %p59 = scmp.eq.s32.totalorder %s19, 0
      %p60 = por %p58, %p59
      %p61 = scmp.ne.s32.totalorder %s53, %s55
      %p62 = scmp.eq.s32.totalorder %s24, 1
      %p63 = por %p61, %p62
      %p64 = scmp.ne.s32.totalorder %s55, %s56
      %p65 = scmp.eq.s32.totalorder %s24, 0
      %p66 = por %p64, %p65
      %p67 = scmp.ne.s32.totalorder %s55, %s56
      %p68 = scmp.eq.s32.totalorder %s25, 1
      %p69 = por %p67, %p68
      %p71 = scmp.ne.s32.totalorder %s56, %s70
      %p72 = scmp.eq.s32.totalorder %s25, 0
      %p73 = por %p71, %p72
      %s75 = sadd.s32 %s74, 1
      %p78 = scmp.eq.s32.totalorder %s19, 1
      %p79 = scmp.ne.s32.totalorder %s74, %s76
      %p80 = scmp.eq.s32.totalorder %s19, 0
      %p81 = por %p79, %p80
      %p82 = scmp.ne.s32.totalorder %s74, %s76
      %p83 = scmp.eq.s32.totalorder %s24, 1
      %p84 = por %p82, %p83
      %p85 = scmp.ne.s32.totalorder %s76, %s77
      %p86 = scmp.eq.s32.totalorder %s24, 0
      %p87 = por %p85, %p86
      %p88 = scmp.ne.s32.totalorder %s76, %s77
      %p89 = scmp.eq.s32.totalorder %s25, 1
      %p90 = por %p88, %p89
      %p92 = scmp.ne.s32.totalorder %s77, %s91
      %p93 = scmp.eq.s32.totalorder %s25, 0
      %p94 = por %p92, %p93
      %s96 = sadd.s32 %s95, 1
      %p99 = scmp.eq.s32.totalorder %s19, 1
      %p100 = scmp.ne.s32.totalorder %s95, %s97
      %p101 = scmp.eq.s32.totalorder %s19, 0
      %p102 = por %p100, %p101
      %p103 = scmp.ne.s32.totalorder %s95, %s97
      %p104 = scmp.eq.s32.totalorder %s24, 1
      %p105 = por %p103, %p104
      %p106 = scmp.ne.s32.totalorder %s97, %s98
      %p107 = scmp.eq.s32.totalorder %s24, 0
      %p108 = por %p106, %p107
      %p109 = scmp.ne.s32.totalorder %s97, %s98
      %p110 = scmp.eq.s32.totalorder %s25, 1
      %p111 = por %p109, %p110
      %p113 = scmp.ne.s32.totalorder %s98, %s112
      %p114 = scmp.eq.s32.totalorder %s25, 0
      %p115 = por %p113, %p114
      %s117 = sadd.s32 %s116, 1
      %p120 = scmp.eq.s32.totalorder %s19, 1
      %p121 = scmp.ne.s32.totalorder %s116, %s118
      %p122 = scmp.eq.s32.totalorder %s19, 0
      %p123 = por %p121, %p122
      %p124 = scmp.ne.s32.totalorder %s116, %s118
      %p125 = scmp.eq.s32.totalorder %s24, 1
      %p126 = por %p124, %p125
      %p127 = scmp.ne.s32.totalorder %s118, %s119
      %p128 = scmp.eq.s32.totalorder %s24, 0
      %p129 = por %p127, %p128
      %p130 = scmp.ne.s32.totalorder %s118, %s119
      %p131 = scmp.eq.s32.totalorder %s25, 1
      %p132 = por %p130, %p131
      %p134 = scmp.ne.s32.totalorder %s119, %s133
      %p135 = scmp.eq.s32.totalorder %s25, 0
      %p136 = por %p134, %p135
      %s138 = sadd.s32 %s137, 1
      %p141 = scmp.eq.s32.totalorder %s19, 1
      %p142 = scmp.ne.s32.totalorder %s137, %s139
      %p143 = scmp.eq.s32.totalorder %s19, 0
      %p144 = por %p142, %p143
      %p145 = scmp.ne.s32.totalorder %s137, %s139
      %p146 = scmp.eq.s32.totalorder %s24, 1
      %p147 = por %p145, %p146
      %p148 = scmp.ne.s32.totalorder %s139, %s140
      %p149 = scmp.eq.s32.totalorder %s24, 0
      %p150 = por %p148, %p149
      %p151 = scmp.ne.s32.totalorder %s139, %s140
      %p152 = scmp.eq.s32.totalorder %s25, 1
      %p153 = por %p151, %p152
      %p155 = scmp.ne.s32.totalorder %s140, %s154
      %p156 = scmp.eq.s32.totalorder %s25, 0
      %p157 = por %p155, %p156
      %s159 = sadd.s32 %s158, 1
      %p162 = scmp.eq.s32.totalorder %s19, 1
      %p163 = scmp.ne.s32.totalorder %s158, %s160
      %p164 = scmp.eq.s32.totalorder %s19, 0
      %p165 = por %p163, %p164
      %p166 = scmp.ne.s32.totalorder %s158, %s160
      %p167 = scmp.eq.s32.totalorder %s24, 1
      %p168 = por %p166, %p167
      %p169 = scmp.ne.s32.totalorder %s160, %s161
      %p170 = scmp.eq.s32.totalorder %s24, 0
      %p171 = por %p169, %p170
      %p172 = scmp.ne.s32.totalorder %s160, %s161
      %p173 = scmp.eq.s32.totalorder %s25, 1
      %p174 = por %p172, %p173
      %p176 = scmp.ne.s32.totalorder %s161, %s175
      %p177 = scmp.eq.s32.totalorder %s25, 0
      %p178 = por %p176, %p177
      %s179 = ssub.s32 %s19, %s26
      %p180 = scmp.eq.s32.totalorder %s179, 0
      %s182 = sadd.s32 %s181, 1
      %s183 = scalar_select %p180, %s181, %s182
      %p186 = pneg %p180
      %p187 = scmp.eq.s32.totalorder %s19, 1
      %p188 = por %p186, %p187
      %p189 = scmp.ne.s32.totalorder %s181, %s184
      %p190 = scmp.eq.s32.totalorder %s19, 0
      %p191 = por %p189, %p190
      %p192 = scmp.ne.s32.totalorder %s181, %s184
      %p193 = scmp.eq.s32.totalorder %s24, 1
      %p194 = por %p192, %p193
      %p195 = scmp.ne.s32.totalorder %s184, %s185
      %p196 = scmp.eq.s32.totalorder %s24, 0
      %p197 = por %p195, %p196
      %p198 = scmp.ne.s32.totalorder %s184, %s185
      %p199 = scmp.eq.s32.totalorder %s25, 1
      %p200 = por %p198, %p199
      %p202 = scmp.ne.s32.totalorder %s185, %s201
      %p203 = scmp.eq.s32.totalorder %s25, 0
      %p204 = por %p202, %p203
      %p205 = scmp.le.s32.totalorder 1, %s19
      %p206 = scmp.lt.s32.totalorder %s19, 3
      %p207 = pnand %p205, %p206
      %p208 = pneg %p207
      // Predicated region
      $region9: #{tpu_custom_call.1} parent=5 // pred_check
        _
      $region10: #{tpu_custom_call.1} parent=5 // pred_check_branch
        %210 = sbr.rel (%p207) target = $region12
      $region11: #{tpu_custom_call.1} parent=5 // pred_region
        %s211 = ssub.s32 %s19, 1
        // Predicated region
        $region13: #{tpu_custom_call.1} parent=11 // pred_check
          %p212 = pneg %p66
        $region14: #{tpu_custom_call.1} parent=11 // pred_check_branch
          %214 = sbr.rel (%p212) target = $region16
        $region15: #{tpu_custom_call.1} parent=11 // pred_region
          _
        $region16: #{tpu_custom_call.1} parent=11 // pred_fallthru
          _
        // Predicated region
        $region17: #{tpu_custom_call.1} parent=11 // pred_check
          %p215 = pneg %p87
        $region18: #{tpu_custom_call.1} parent=11 // pred_check_branch
          %217 = sbr.rel (%p215) target = $region20
        $region19: #{tpu_custom_call.1} parent=11 // pred_region
          _
        $region20: #{tpu_custom_call.1} parent=11 // pred_fallthru
          _
        // Predicated region
        $region21: #{tpu_custom_call.1} parent=11 // pred_check
          %p218 = pneg %p108
        $region22: #{tpu_custom_call.1} parent=11 // pred_check_branch
          %220 = sbr.rel (%p218) target = $region24
        $region23: #{tpu_custom_call.1} parent=11 // pred_region
          _
        $region24: #{tpu_custom_call.1} parent=11 // pred_fallthru
          _
        // Predicated region
        $region25: #{tpu_custom_call.1} parent=11 // pred_check
          %p221 = pneg %p129
        $region26: #{tpu_custom_call.1} parent=11 // pred_check_branch
          %223 = sbr.rel (%p221) target = $region28
        $region27: #{tpu_custom_call.1} parent=11 // pred_region
          _
        $region28: #{tpu_custom_call.1} parent=11 // pred_fallthru
          _
        // Predicated region
        $region29: #{tpu_custom_call.1} parent=11 // pred_check
          %p224 = pneg %p150
        $region30: #{tpu_custom_call.1} parent=11 // pred_check_branch
          %226 = sbr.rel (%p224) target = $region32
        $region31: #{tpu_custom_call.1} parent=11 // pred_region
          _
        $region32: #{tpu_custom_call.1} parent=11 // pred_fallthru
          _
        // Predicated region
        $region33: #{tpu_custom_call.1} parent=11 // pred_check
          %p227 = pneg %p171
        $region34: #{tpu_custom_call.1} parent=11 // pred_check_branch
          %229 = sbr.rel (%p227) target = $region36
        $region35: #{tpu_custom_call.1} parent=11 // pred_region
          _
        $region36: #{tpu_custom_call.1} parent=11 // pred_fallthru
          _
      $region12: #{tpu_custom_call.1} parent=5 // pred_fallthru
        _
      %p230 = scmp.lt.s32.totalorder %s19, 2
      // Predicated region
      $region37: #{tpu_custom_call.1} parent=5 // pred_check
        %p231 = pneg %p230
      $region38: #{tpu_custom_call.1} parent=5 // pred_check_branch
        %233 = sbr.rel (%p231) target = $region40
      $region39: #{tpu_custom_call.1} parent=5 // pred_region
        // Predicated region
        $region41: #{tpu_custom_call.1} parent=39 // pred_check
          %p234 = pneg %p39
        $region42: #{tpu_custom_call.1} parent=39 // pred_check_branch
          %236 = sbr.rel (%p234) target = $region44
        $region43: #{tpu_custom_call.1} parent=39 // pred_region
          %s237 = sand.u32 %s29, 1
          %s238 = scalar_lea.sflag [#allocation4], %s237
          %s239 = sand.u32 %s29, 1
          %s240 = smul.addr %s239, 64
          %s241 = scalar_lea.vmem [#allocation3], %s240
          %s242 = smul.u32 4, %s19
          %244 = vsyncadd %s238, 0
          %s245 = smul.addr %s242, 2
          %s246 = smul.addr %s245, 8
          %s247 = scalar_lea.hbm %s0, %s246
          %s248 = sshll.u32 %s247, 4
          %s249 = int_to_ptr.hbm [resolvable:$true] %s248
          %s250 = sshll.u32 %s241, 4
          %s251 = int_to_ptr.vmem [resolvable:$true] %s250
          %256 = dma.hbm_to_vmem [thread:$0]  %s249, 1024, %s251, %s238, 128, 128, 8
        $region44: #{tpu_custom_call.1} parent=39 // pred_fallthru
          _
      $region40: #{tpu_custom_call.1} parent=5 // pred_fallthru
        _
      %p257 = scmp.le.s32.totalorder 1, %s19
      %p258 = scmp.lt.s32.totalorder %s19, 3
      %p259 = pnand %p257, %p258
      %p260 = pneg %p259
      // Predicated region
      $region45: #{tpu_custom_call.1} parent=5 // pred_check
        _
      $region46: #{tpu_custom_call.1} parent=5 // pred_check_branch
        %262 = sbr.rel (%p259) target = $region48
      $region47: #{tpu_custom_call.1} parent=5 // pred_region
        %s263 = ssub.s32 %s19, 1
        %s264 = sand.u32 %s32, 1
        %s265 = scalar_lea.sflag [#allocation4], %s264
        %s266 = sand.u32 %s32, 1
        %s267 = smul.addr %s266, 64
        %s268 = scalar_lea.vmem [#allocation3], %s267
        // Predicated region
        $region49: #{tpu_custom_call.1} parent=47 // pred_check
          %p269 = pneg %p45
        $region50: #{tpu_custom_call.1} parent=47 // pred_check_branch
          %271 = sbr.rel (%p269) target = $region52
        $region51: #{tpu_custom_call.1} parent=47 // pred_region
          %273 = dma.done %s265, 1024
        $region52: #{tpu_custom_call.1} parent=47 // pred_fallthru
          _
        %s274 = sand.u32 %s32, 1
        %s275 = scalar_lea.sflag [#allocation4], %s274
        %s276 = sand.u32 %s32, 1
        %s277 = smul.addr %s276, 64
        %s278 = scalar_lea.vmem [#allocation3], %s277
        %p279 = pneg %p45
        %p280 = pneg %p42
        %p281 = pneg %p66
        %p282 = pneg %p63
        %p283 = pneg %p87
        %p284 = pneg %p84
        %p285 = pneg %p108
        %p286 = pneg %p105
        %p287 = pneg %p129
        %p288 = pneg %p126
        %p289 = pneg %p150
        %p290 = pneg %p147
        %p291 = pneg %p171
        %p292 = pneg %p168
        %p293 = pneg %p197
        %p294 = pneg %p194
        %s295 = sand.u32 %s184, 1
        %s296 = scalar_lea.sflag [#allocation5], %s295
        %s297 = sand.u32 %s184, 1
        %s298 = smul.addr %s297, 32
        %s299 = scalar_lea.vmem [#allocation6], %s298
        %s300 = smul.u32 4, %s24
        %s301 = smul.u32 2, %s24
        %v303 = vld [vmem:[%s268] sm:$0xff]
        %v304 = vld [vmem:[%s268 + $0x8] sm:$0xff]
        %v305 = vld [vmem:[%s268 + $0x10] sm:$0xff]
        %v306 = vld [vmem:[%s268 + $0x18] sm:$0xff]
        %v307 = vld [vmem:[%s268 + $0x20] sm:$0xff]
        %v308 = vld [vmem:[%s268 + $0x28] sm:$0xff]
        %v309 = vld [vmem:[%s268 + $0x30] sm:$0xff]
        %v310 = vld [vmem:[%s268 + $0x38] sm:$0xff]
        %vm311 = vcmask 261120
        %v312 = vsel %vm311, %v303, 0.0
        %313 = vadd.xlane.f32.xlu0 %v312
        %v314 = vpop.xlane.xlu0 %313
        %v315 = vsel %vm311, %v304, 0.0
        %316 = vadd.xlane.f32.xlu0 %v315
        %v317 = vpop.xlane.xlu0 %316
        %v318 = vsel %vm311, %v305, 0.0
        %319 = vadd.xlane.f32.xlu0 %v318
        %v320 = vpop.xlane.xlu0 %319
        %v321 = vsel %vm311, %v306, 0.0
        %322 = vadd.xlane.f32.xlu0 %v321
        %v323 = vpop.xlane.xlu0 %322
        %v324 = vsel %vm311, %v307, 0.0
        %325 = vadd.xlane.f32.xlu0 %v324
        %v326 = vpop.xlane.xlu0 %325
        %v327 = vsel %vm311, %v308, 0.0
        %328 = vadd.xlane.f32.xlu0 %v327
        %v329 = vpop.xlane.xlu0 %328
        %v330 = vsel %vm311, %v309, 0.0
        %331 = vadd.xlane.f32.xlu0 %v330
        %v332 = vpop.xlane.xlu0 %331
        %v333 = vsel %vm311, %v310, 0.0
        %334 = vadd.xlane.f32.xlu0 %v333
        %v335 = vpop.xlane.xlu0 %334
        %v336 = vrcp.pop 32.0
        %v337 = vmul.f32 32.0, %v336
        %v338 = vsub.f32 1.0, %v337
        %v339 = vmul.f32 %v336, %v338
        %v340 = vadd.f32 %v336, %v339
        %vm341 = vweird.f32 %v336
        %v342 = vsel %vm341, %v336, %v340
        %v343 = vmul.f32 %v314, %v342
        %v344 = vmul.f32 %v317, %v342
        %v345 = vmul.f32 %v320, %v342
        %v346 = vmul.f32 %v323, %v342
        %v347 = vmul.f32 %v326, %v342
        %v348 = vmul.f32 %v329, %v342
        %v349 = vmul.f32 %v332, %v342
        %v350 = vmul.f32 %v335, %v342
        %v351 = vsub.f32 %v303, %v343
        %v352 = vsub.f32 %v304, %v344
        %v353 = vsub.f32 %v305, %v345
        %v354 = vsub.f32 %v306, %v346
        %v355 = vsub.f32 %v307, %v347
        %v356 = vsub.f32 %v308, %v348
        %v357 = vsub.f32 %v309, %v349
        %v358 = vsub.f32 %v310, %v350
        %v359 = vmul.f32 %v351, %v351
        %v360 = vmul.f32 %v352, %v352
        %v361 = vmul.f32 %v353, %v353
        %v362 = vmul.f32 %v354, %v354
        %v363 = vmul.f32 %v355, %v355
        %v364 = vmul.f32 %v356, %v356
        %v365 = vmul.f32 %v357, %v357
        %v366 = vmul.f32 %v358, %v358
        %v367 = vsel %vm311, %v359, 0.0
        %368 = vadd.xlane.f32.xlu0 %v367
        %v369 = vpop.xlane.xlu0 %368
        %v370 = vsel %vm311, %v360, 0.0
        %371 = vadd.xlane.f32.xlu0 %v370
        %v372 = vpop.xlane.xlu0 %371
        %v373 = vsel %vm311, %v361, 0.0
        %374 = vadd.xlane.f32.xlu0 %v373
        %v375 = vpop.xlane.xlu0 %374
        %v376 = vsel %vm311, %v362, 0.0
        %377 = vadd.xlane.f32.xlu0 %v376
        %v378 = vpop.xlane.xlu0 %377
        %v379 = vsel %vm311, %v363, 0.0
        %380 = vadd.xlane.f32.xlu0 %v379
        %v381 = vpop.xlane.xlu0 %380
        %v382 = vsel %vm311, %v364, 0.0
        %383 = vadd.xlane.f32.xlu0 %v382
        %v384 = vpop.xlane.xlu0 %383
        %v385 = vsel %vm311, %v365, 0.0
        %386 = vadd.xlane.f32.xlu0 %v385
        %v387 = vpop.xlane.xlu0 %386
        %v388 = vsel %vm311, %v366, 0.0
        %389 = vadd.xlane.f32.xlu0 %v388
        %v390 = vpop.xlane.xlu0 %389
        %v391 = vmul.f32 %v369, %v342
        %v392 = vmul.f32 %v372, %v342
        %v393 = vmul.f32 %v375, %v342
        %v394 = vmul.f32 %v378, %v342
        %v395 = vmul.f32 %v381, %v342
        %v396 = vmul.f32 %v384, %v342
        %v397 = vmul.f32 %v387, %v342
        %v398 = vmul.f32 %v390, %v342
        %v399 = vadd.f32 %v391, 1e-05
        %v400 = vadd.f32 %v392, 1e-05
        %v401 = vadd.f32 %v393, 1e-05
        %v402 = vadd.f32 %v394, 1e-05
        %v403 = vadd.f32 %v395, 1e-05
        %v404 = vadd.f32 %v396, 1e-05
        %v405 = vadd.f32 %v397, 1e-05
        %v406 = vadd.f32 %v398, 1e-05
        %v407 = vrsqrt.pop %v399
        %v408 = vmul.f32 %v407, %v399
        %v409 = vmul.f32 %v408, %v407
        %v410 = vmul.f32 0.5, %v409
        %v411 = vsub.f32 1.5, %v410
        %v412 = vmul.f32 %v407, %v411
        %vm413 = vweird.f32 %v399
        %vm414 = vweird.f32 %v407
        %vm415 = vmor %vm413, %vm414
        %v416 = vsel %vm415, %v407, %v412
        %v417 = vrsqrt.pop %v400
        %v418 = vmul.f32 %v417, %v400
        %v419 = vmul.f32 %v418, %v417
        %v420 = vmul.f32 0.5, %v419
        %v421 = vsub.f32 1.5, %v420
        %v422 = vmul.f32 %v417, %v421
        %vm423 = vweird.f32 %v400
        %vm424 = vweird.f32 %v417
        %vm425 = vmor %vm423, %vm424
        %v426 = vsel %vm425, %v417, %v422
        %v427 = vrsqrt.pop %v401
        %v428 = vmul.f32 %v427, %v401
        %v429 = vmul.f32 %v428, %v427
        %v430 = vmul.f32 0.5, %v429
        %v431 = vsub.f32 1.5, %v430
        %v432 = vmul.f32 %v427, %v431
        %vm433 = vweird.f32 %v401
        %vm434 = vweird.f32 %v427
        %vm435 = vmor %vm433, %vm434
        %v436 = vsel %vm435, %v427, %v432
        %v437 = vrsqrt.pop %v402
        %v438 = vmul.f32 %v437, %v402
        %v439 = vmul.f32 %v438, %v437
        %v440 = vmul.f32 0.5, %v439
        %v441 = vsub.f32 1.5, %v440
        %v442 = vmul.f32 %v437, %v441
        %vm443 = vweird.f32 %v402
        %vm444 = vweird.f32 %v437
        %vm445 = vmor %vm443, %vm444
        %v446 = vsel %vm445, %v437, %v442
        %v447 = vrsqrt.pop %v403
        %v448 = vmul.f32 %v447, %v403
        %v449 = vmul.f32 %v448, %v447
        %v450 = vmul.f32 0.5, %v449
        %v451 = vsub.f32 1.5, %v450
        %v452 = vmul.f32 %v447, %v451
        %vm453 = vweird.f32 %v403
        %vm454 = vweird.f32 %v447
        %vm455 = vmor %vm453, %vm454
        %v456 = vsel %vm455, %v447, %v452
        %v457 = vrsqrt.pop %v404
        %v458 = vmul.f32 %v457, %v404
        %v459 = vmul.f32 %v458, %v457
        %v460 = vmul.f32 0.5, %v459
        %v461 = vsub.f32 1.5, %v460
        %v462 = vmul.f32 %v457, %v461
        %vm463 = vweird.f32 %v404
        %vm464 = vweird.f32 %v457
        %vm465 = vmor %vm463, %vm464
        %v466 = vsel %vm465, %v457, %v462
        %v467 = vrsqrt.pop %v405
        %v468 = vmul.f32 %v467, %v405
        %v469 = vmul.f32 %v468, %v467
        %v470 = vmul.f32 0.5, %v469
        %v471 = vsub.f32 1.5, %v470
        %v472 = vmul.f32 %v467, %v471
        %vm473 = vweird.f32 %v405
        %vm474 = vweird.f32 %v467
        %vm475 = vmor %vm473, %vm474
        %v476 = vsel %vm475, %v467, %v472
        %v477 = vrsqrt.pop %v406
        %v478 = vmul.f32 %v477, %v406
        %v479 = vmul.f32 %v478, %v477
        %v480 = vmul.f32 0.5, %v479
        %v481 = vsub.f32 1.5, %v480
        %v482 = vmul.f32 %v477, %v481
        %vm483 = vweird.f32 %v406
        %vm484 = vweird.f32 %v477
        %vm485 = vmor %vm483, %vm484
        %v486 = vsel %vm485, %v477, %v482
        %v487 = vmul.f32 %v351, %v416
        %v488 = vmul.f32 %v352, %v426
        %v489 = vmul.f32 %v353, %v436
        %v490 = vmul.f32 %v354, %v446
        %v491 = vmul.f32 %v355, %v456
        %v492 = vmul.f32 %v356, %v466
        %v493 = vmul.f32 %v357, %v476
        %v494 = vmul.f32 %v358, %v486
        %v495 = vpack.c.bf16 %v488, %v487
        %v496 = vpack.c.bf16 %v490, %v489
        %v497 = vpack.c.bf16 %v492, %v491
        %v498 = vpack.c.bf16 %v494, %v493
        %v499 = vld [vmem:[%s1] sm:$0xf]
        %v500 = vld [vmem:[%s1 + $0x4] sm:$0xf]
        %v501 = vld [vmem:[%s1 + $0x8] sm:$0xf]
        %v502 = vld [vmem:[%s1 + $0xc] sm:$0xf]
        %v503 = vld [vmem:[%s2] sm:$0x1]
        %v505 = vperm.slane %v503, 0
        %v511 = vunpack.c.l.b16 %v499
        %v512 = vunpack.c.l.b16 %v500
        %v513 = vunpack.c.l.b16 %v501
        %v514 = vunpack.c.l.b16 %v502
        %v515 = vpack.c.b16 %v512, %v511
        %v516 = vpack.c.b16 %v514, %v513
        %v520 = vsel %vm311, %v495, 0
        %v523 = vsel %vm311, %v496, 0
        %v526 = vsel %vm311, %v497, 0
        %v529 = vsel %vm311, %v498, 0
        %531 = vmatpush.bf16.msra.mxu0 0
        %532 = vmatpush.bf16.msra.mxu0 0
        %533 = vmatpush.bf16.msra.mxu0 0
        %534 = vmatpush.bf16.msra.mxu0 0
        %535 = vmatpush.bf16.msra.mxu0 0
        %536 = vmatpush.bf16.msra.mxu0 0
        %537 = vmatpush.bf16.msra.mxu0 %v516
        %538 = vmatpush.bf16.msra.mxu0 %v515
        %539 = vmatmul.bf16.gmra.mxu0 %v520
        %v540 = vpop.f32.mrf.mxu0
        %v541 = vadd.f32 %v505, %v540
        %v542 = vpop.f32.mrf.mxu0
        %v543 = vadd.f32 %v505, %v542
        %544 = vmatmul.bf16.gmra.mxu0 %v523
        %v545 = vpop.f32.mrf.mxu0
        %v546 = vadd.f32 %v505, %v545
        %v547 = vpop.f32.mrf.mxu0
        %v548 = vadd.f32 %v505, %v547
        %549 = vmatmul.bf16.gmra.mxu0 %v526
        %v550 = vpop.f32.mrf.mxu0
        %v551 = vadd.f32 %v505, %v550
        %v552 = vpop.f32.mrf.mxu0
        %v553 = vadd.f32 %v505, %v552
        %554 = vmatmul.bf16.gmra.mxu0 %v529
        %v555 = vpop.f32.mrf.mxu0
        %v556 = vadd.f32 %v505, %v555
        %v557 = vpop.f32.mrf.mxu0
        %v558 = vadd.f32 %v505, %v557
        %559 = vdwg.mxu0
        %v560 = vxor.u32 %v541, 2147483648
        %v561 = vxor.u32 %v543, 2147483648
        %v562 = vxor.u32 %v546, 2147483648
        %v563 = vxor.u32 %v548, 2147483648
        %v564 = vxor.u32 %v551, 2147483648
        %v565 = vxor.u32 %v553, 2147483648
        %v566 = vxor.u32 %v556, 2147483648
        %v567 = vxor.u32 %v558, 2147483648
        %v568 = vmul.f32 %v560, 1.442695
        %v569 = vpow.pop %v568
        %v570 = vmul.f32 %v561, 1.442695
        %v571 = vpow.pop %v570
        %v572 = vmul.f32 %v562, 1.442695
        %v573 = vpow.pop %v572
        %v574 = vmul.f32 %v563, 1.442695
        %v575 = vpow.pop %v574
        %v576 = vmul.f32 %v564, 1.442695
        %v577 = vpow.pop %v576
        %v578 = vmul.f32 %v565, 1.442695
        %v579 = vpow.pop %v578
        %v580 = vmul.f32 %v566, 1.442695
        %v581 = vpow.pop %v580
        %v582 = vmul.f32 %v567, 1.442695
        %v583 = vpow.pop %v582
        %v584 = vadd.f32 %v569, 1.0
        %v585 = vadd.f32 %v571, 1.0
        %v586 = vadd.f32 %v573, 1.0
        %v587 = vadd.f32 %v575, 1.0
        %v588 = vadd.f32 %v577, 1.0
        %v589 = vadd.f32 %v579, 1.0
        %v590 = vadd.f32 %v581, 1.0
        %v591 = vadd.f32 %v583, 1.0
        %v592 = vrcp.pop %v584
        %v593 = vmul.f32 %v584, %v592
        %v594 = vsub.f32 1.0, %v593
        %v595 = vmul.f32 %v592, %v594
        %v596 = vadd.f32 %v592, %v595
        %vm597 = vweird.f32 %v584
        %vm598 = vweird.f32 %v592
        %vm599 = vmor %vm597, %vm598
        %v600 = vsel %vm599, %v592, %v596
        %v601 = vand.u32 2147483647, %v584
        %vm602 = vcmp.eq.f32.partialorder %v601, 8.507059e+37
        %v603 = vand.u32 %v584, 2147483648
        %v604 = vor.u32 1.1754944e-38, %v603
        %v605 = vsel %vm602, %v604, %v600
        %v606 = vmul.f32 1.0, %v605
        %v607 = vrcp.pop %v585
        %v608 = vmul.f32 %v585, %v607
        %v609 = vsub.f32 1.0, %v608
        %v610 = vmul.f32 %v607, %v609
        %v611 = vadd.f32 %v607, %v610
        %vm612 = vweird.f32 %v585
        %vm613 = vweird.f32 %v607
        %vm614 = vmor %vm612, %vm613
        %v615 = vsel %vm614, %v607, %v611
        %v616 = vand.u32 2147483647, %v585
        %vm617 = vcmp.eq.f32.partialorder %v616, 8.507059e+37
        %v618 = vand.u32 %v585, 2147483648
        %v619 = vor.u32 1.1754944e-38, %v618
        %v620 = vsel %vm617, %v619, %v615
        %v621 = vmul.f32 1.0, %v620
        %v622 = vrcp.pop %v586
        %v623 = vmul.f32 %v586, %v622
        %v624 = vsub.f32 1.0, %v623
        %v625 = vmul.f32 %v622, %v624
        %v626 = vadd.f32 %v622, %v625
        %vm627 = vweird.f32 %v586
        %vm628 = vweird.f32 %v622
        %vm629 = vmor %vm627, %vm628
        %v630 = vsel %vm629, %v622, %v626
        %v631 = vand.u32 2147483647, %v586
        %vm632 = vcmp.eq.f32.partialorder %v631, 8.507059e+37
        %v633 = vand.u32 %v586, 2147483648
        %v634 = vor.u32 1.1754944e-38, %v633
        %v635 = vsel %vm632, %v634, %v630
        %v636 = vmul.f32 1.0, %v635
        %v637 = vrcp.pop %v587
        %v638 = vmul.f32 %v587, %v637
        %v639 = vsub.f32 1.0, %v638
        %v640 = vmul.f32 %v637, %v639
        %v641 = vadd.f32 %v637, %v640
        %vm642 = vweird.f32 %v587
        %vm643 = vweird.f32 %v637
        %vm644 = vmor %vm642, %vm643
        %v645 = vsel %vm644, %v637, %v641
        %v646 = vand.u32 2147483647, %v587
        %vm647 = vcmp.eq.f32.partialorder %v646, 8.507059e+37
        %v648 = vand.u32 %v587, 2147483648
        %v649 = vor.u32 1.1754944e-38, %v648
        %v650 = vsel %vm647, %v649, %v645
        %v651 = vmul.f32 1.0, %v650
        %v652 = vrcp.pop %v588
        %v653 = vmul.f32 %v588, %v652
        %v654 = vsub.f32 1.0, %v653
        %v655 = vmul.f32 %v652, %v654
        %v656 = vadd.f32 %v652, %v655
        %vm657 = vweird.f32 %v588
        %vm658 = vweird.f32 %v652
        %vm659 = vmor %vm657, %vm658
        %v660 = vsel %vm659, %v652, %v656
        %v661 = vand.u32 2147483647, %v588
        %vm662 = vcmp.eq.f32.partialorder %v661, 8.507059e+37
        %v663 = vand.u32 %v588, 2147483648
        %v664 = vor.u32 1.1754944e-38, %v663
        %v665 = vsel %vm662, %v664, %v660
        %v666 = vmul.f32 1.0, %v665
        %v667 = vrcp.pop %v589
        %v668 = vmul.f32 %v589, %v667
        %v669 = vsub.f32 1.0, %v668
        %v670 = vmul.f32 %v667, %v669
        %v671 = vadd.f32 %v667, %v670
        %vm672 = vweird.f32 %v589
        %vm673 = vweird.f32 %v667
        %vm674 = vmor %vm672, %vm673
        %v675 = vsel %vm674, %v667, %v671
        %v676 = vand.u32 2147483647, %v589
        %vm677 = vcmp.eq.f32.partialorder %v676, 8.507059e+37
        %v678 = vand.u32 %v589, 2147483648
        %v679 = vor.u32 1.1754944e-38, %v678
        %v680 = vsel %vm677, %v679, %v675
        %v681 = vmul.f32 1.0, %v680
        %v682 = vrcp.pop %v590
        %v683 = vmul.f32 %v590, %v682
        %v684 = vsub.f32 1.0, %v683
        %v685 = vmul.f32 %v682, %v684
        %v686 = vadd.f32 %v682, %v685
        %vm687 = vweird.f32 %v590
        %vm688 = vweird.f32 %v682
        %vm689 = vmor %vm687, %vm688
        %v690 = vsel %vm689, %v682, %v686
        %v691 = vand.u32 2147483647, %v590
        %vm692 = vcmp.eq.f32.partialorder %v691, 8.507059e+37
        %v693 = vand.u32 %v590, 2147483648
        %v694 = vor.u32 1.1754944e-38, %v693
        %v695 = vsel %vm692, %v694, %v690
        %v696 = vmul.f32 1.0, %v695
        %v697 = vrcp.pop %v591
        %v698 = vmul.f32 %v591, %v697
        %v699 = vsub.f32 1.0, %v698
        %v700 = vmul.f32 %v697, %v699
        %v701 = vadd.f32 %v697, %v700
        %vm702 = vweird.f32 %v591
        %vm703 = vweird.f32 %v697
        %vm704 = vmor %vm702, %vm703
        %v705 = vsel %vm704, %v697, %v701
        %v706 = vand.u32 2147483647, %v591
        %vm707 = vcmp.eq.f32.partialorder %v706, 8.507059e+37
        %v708 = vand.u32 %v591, 2147483648
        %v709 = vor.u32 1.1754944e-38, %v708
        %v710 = vsel %vm707, %v709, %v705
        %v711 = vmul.f32 1.0, %v710
        %720 = vrot.lane.b32.xlu0 %v606, 64
        %v721 = vpop.permute.xlu0 %720
        %722 = vrot.lane.b32.xlu0 %v621, 64
        %v723 = vpop.permute.xlu0 %722
        %724 = vrot.lane.b32.xlu0 %v636, 64
        %v725 = vpop.permute.xlu0 %724
        %726 = vrot.lane.b32.xlu0 %v651, 64
        %v727 = vpop.permute.xlu0 %726
        %728 = vrot.lane.b32.xlu0 %v666, 64
        %v729 = vpop.permute.xlu0 %728
        %730 = vrot.lane.b32.xlu0 %v681, 64
        %v731 = vpop.permute.xlu0 %730
        %732 = vrot.lane.b32.xlu0 %v696, 64
        %v733 = vpop.permute.xlu0 %732
        %734 = vrot.lane.b32.xlu0 %v711, 64
        %v735 = vpop.permute.xlu0 %734
        %v744 = vmul.f32 %v541, %v721
        %v745 = vmul.f32 %v543, %v723
        %v746 = vmul.f32 %v546, %v725
        %v747 = vmul.f32 %v548, %v727
        %v748 = vmul.f32 %v551, %v729
        %v749 = vmul.f32 %v553, %v731
        %v750 = vmul.f32 %v556, %v733
        %v751 = vmul.f32 %v558, %v735
        %756 = vrot.lane.b32.xlu0 %v746, 64
        %v757 = vpop.permute.xlu0 %756
        %758 = vrot.lane.b32.xlu0 %v747, 64
        %v759 = vpop.permute.xlu0 %758
        %760 = vrot.lane.b32.xlu0 %v750, 64
        %v761 = vpop.permute.xlu0 %760
        %762 = vrot.lane.b32.xlu0 %v751, 64
        %v763 = vpop.permute.xlu0 %762
        %vm768 = vcmask 523264
        %v769 = vsel %vm768, %v744, %v757
        %v770 = vsel %vm768, %v745, %v759
        %v771 = vsel %vm768, %v748, %v761
        %v772 = vsel %vm768, %v749, %v763
        %773 = vst [vmem:[#allocation2] sm:$0xff] 0.0
        %774 = vst [vmem:[#allocation2 + $0x8] sm:$0xff] 0.0
        %775 = vst [vmem:[#allocation2 + $0x30] sm:$0xff] 0.0
        %776 = vst [vmem:[#allocation2 + $0x38] sm:$0xff] 0.0
        %777 = vst [vmem:[#allocation2 + $0x20] sm:$0xff] 0.0
        %778 = vst [vmem:[#allocation2 + $0x28] sm:$0xff] 0.0
        %779 = vst [vmem:[#allocation2 + $0x50] sm:$0xff] 0.0
        %780 = vst [vmem:[#allocation2 + $0x58] sm:$0xff] 0.0
        %781 = vst [vmem:[#allocation2 + $0x10] sm:$0xff] %v769
        %782 = vst [vmem:[#allocation2 + $0x18] sm:$0xff] %v770
        %783 = vst [vmem:[#allocation2 + $0x40] sm:$0xff] %v771
        %784 = vst [vmem:[#allocation2 + $0x48] sm:$0xff] %v772
        loop: start=0, step=1, limit=2
        $region53: #{tpu_custom_call.1} parent=47 // loop_pre_header
          _
        $region54: #{tpu_custom_call.1} parent=47 // loop_header
          %s786 = sphi 0, %s790
          %p787 = scmp.ge.s32.totalorder %s786, 2
        $region55: #{tpu_custom_call.1} parent=47 // loop_header_branch
          %789 = sbr.rel (%p787) target = $region59
        $region56: #{tpu_custom_call.1} parent=47 // loop_body
          %s791 = smul.u32 %s786, 48
          %s792 = scalar_lea.vmem [#allocation2], %s791
          %v793 = vld [vmem:[%s792 + $0x1] sm:$0xff]
          %v794 = vld [vmem:[%s792 + $0x9] sm:$0xff]
          %v795 = vld [vmem:[%s3] sm:$0x1]
          %v796 = vperm.slane %v795, 0
          %v797 = vmul.f32 %v793, %v796
          %v798 = vmul.f32 %v794, %v796
          %v799 = vld [vmem:[%s792 + $0x2] sm:$0xff]
          %v800 = vld [vmem:[%s792 + $0xa] sm:$0xff]
          %v801 = vld [vmem:[%s3 + $0x1] sm:$0x1]
          %v802 = vperm.slane %v801, 0
          %v803 = vmul.f32 %v799, %v802
          %v804 = vmul.f32 %v800, %v802
          %v805 = vadd.f32 %v797, %v803
          %v806 = vadd.f32 %v798, %v804
          %v807 = vld [vmem:[%s792 + $0x3] sm:$0xff]
          %v808 = vld [vmem:[%s792 + $0xb] sm:$0xff]
          %v809 = vld [vmem:[%s3 + $0x2] sm:$0x1]
          %v810 = vperm.slane %v809, 0
          %v811 = vmul.f32 %v807, %v810
          %v812 = vmul.f32 %v808, %v810
          %v813 = vadd.f32 %v805, %v811
          %v814 = vadd.f32 %v806, %v812
          %v815 = vld [vmem:[%s792 + $0x4] sm:$0xff]
          %v816 = vld [vmem:[%s792 + $0xc] sm:$0xff]
          %v817 = vld [vmem:[%s3 + $0x3] sm:$0x1]
          %v818 = vperm.slane %v817, 0
          %v819 = vmul.f32 %v815, %v818
          %v820 = vmul.f32 %v816, %v818
          %v821 = vadd.f32 %v813, %v819
          %v822 = vadd.f32 %v814, %v820
          %v823 = vld [vmem:[%s792 + $0x5] sm:$0xff]
          %v824 = vld [vmem:[%s792 + $0xd] sm:$0xff]
          %v825 = vld [vmem:[%s3 + $0x4] sm:$0x1]
          %v826 = vperm.slane %v825, 0
          %v827 = vmul.f32 %v823, %v826
          %v828 = vmul.f32 %v824, %v826
          %v829 = vadd.f32 %v821, %v827
          %v830 = vadd.f32 %v822, %v828
          %v831 = vld [vmem:[%s792 + $0x6] sm:$0xff]
          %v832 = vld [vmem:[%s792 + $0xe] sm:$0xff]
          %v833 = vld [vmem:[%s3 + $0x5] sm:$0x1]
          %v834 = vperm.slane %v833, 0
          %v835 = vmul.f32 %v831, %v834
          %v836 = vmul.f32 %v832, %v834
          %v837 = vadd.f32 %v829, %v835
          %v838 = vadd.f32 %v830, %v836
          %v839 = vld [vmem:[%s792 + $0x7] sm:$0xff]
          %v840 = vld [vmem:[%s792 + $0xf] sm:$0xff]
          %v841 = vld [vmem:[%s3 + $0x6] sm:$0x1]
          %v842 = vperm.slane %v841, 0
          %v843 = vmul.f32 %v839, %v842
          %v844 = vmul.f32 %v840, %v842
          %v845 = vadd.f32 %v837, %v843
          %v846 = vadd.f32 %v838, %v844
          %v847 = vld [vmem:[%s792 + $0x8] sm:$0xff]
          %v848 = vld [vmem:[%s792 + $0x10] sm:$0xff]
          %v849 = vld [vmem:[%s3 + $0x7] sm:$0x1]
          %v850 = vperm.slane %v849, 0
          %v851 = vmul.f32 %v847, %v850
          %v852 = vmul.f32 %v848, %v850
          %v853 = vadd.f32 %v845, %v851
          %v854 = vadd.f32 %v846, %v852
          %v855 = vld [vmem:[%s792 + $0x11] sm:$0xff]
          %v856 = vld [vmem:[%s3 + $0x8] sm:$0x1]
          %v857 = vperm.slane %v856, 0
          %v858 = vmul.f32 %v794, %v857
          %v859 = vmul.f32 %v855, %v857
          %v860 = vadd.f32 %v853, %v858
          %v861 = vadd.f32 %v854, %v859
          %v862 = vld [vmem:[%s792 + $0x12] sm:$0xff]
          %v863 = vld [vmem:[%s3 + $0x9] sm:$0x1]
          %v864 = vperm.slane %v863, 0
          %v865 = vmul.f32 %v800, %v864
          %v866 = vmul.f32 %v862, %v864
          %v867 = vadd.f32 %v860, %v865
          %v868 = vadd.f32 %v861, %v866
          %v869 = vld [vmem:[%s792 + $0x13] sm:$0xff]
          %v870 = vld [vmem:[%s3 + $0xa] sm:$0x1]
          %v871 = vperm.slane %v870, 0
          %v872 = vmul.f32 %v808, %v871
          %v873 = vmul.f32 %v869, %v871
          %v874 = vadd.f32 %v867, %v872
          %v875 = vadd.f32 %v868, %v873
          %v876 = vld [vmem:[%s792 + $0x14] sm:$0xff]
          %v877 = vld [vmem:[%s3 + $0xb] sm:$0x1]
          %v878 = vperm.slane %v877, 0
          %v879 = vmul.f32 %v816, %v878
          %v880 = vmul.f32 %v876, %v878
          %v881 = vadd.f32 %v874, %v879
          %v882 = vadd.f32 %v875, %v880
          %v883 = vld [vmem:[%s792 + $0x15] sm:$0xff]
          %v884 = vld [vmem:[%s3 + $0xc] sm:$0x1]
          %v885 = vperm.slane %v884, 0
          %v886 = vmul.f32 %v824, %v885
          %v887 = vmul.f32 %v883, %v885
          %v888 = vadd.f32 %v881, %v886
          %v889 = vadd.f32 %v882, %v887
          %v890 = vld [vmem:[%s792 + $0x16] sm:$0xff]
          %v891 = vld [vmem:[%s3 + $0xd] sm:$0x1]
          %v892 = vperm.slane %v891, 0
          %v893 = vmul.f32 %v832, %v892
          %v894 = vmul.f32 %v890, %v892
          %v895 = vadd.f32 %v888, %v893
          %v896 = vadd.f32 %v889, %v894
          %v897 = vld [vmem:[%s792 + $0x17] sm:$0xff]
          %v898 = vld [vmem:[%s3 + $0xe] sm:$0x1]
          %v899 = vperm.slane %v898, 0
          %v900 = vmul.f32 %v840, %v899
          %v901 = vmul.f32 %v897, %v899
          %v902 = vadd.f32 %v895, %v900
          %v903 = vadd.f32 %v896, %v901
          %v904 = vld [vmem:[%s792 + $0x18] sm:$0xff]
          %v905 = vld [vmem:[%s3 + $0xf] sm:$0x1]
          %v906 = vperm.slane %v905, 0
          %v907 = vmul.f32 %v848, %v906
          %v908 = vmul.f32 %v904, %v906
          %v909 = vadd.f32 %v902, %v907
          %v910 = vadd.f32 %v903, %v908
          %v911 = vld [vmem:[%s792 + $0x19] sm:$0xff]
          %v912 = vld [vmem:[%s3 + $0x10] sm:$0x1]
          %v913 = vperm.slane %v912, 0
          %v914 = vmul.f32 %v855, %v913
          %v915 = vmul.f32 %v911, %v913
          %v916 = vadd.f32 %v909, %v914
          %v917 = vadd.f32 %v910, %v915
          %v918 = vld [vmem:[%s792 + $0x1a] sm:$0xff]
          %v919 = vld [vmem:[%s3 + $0x11] sm:$0x1]
          %v920 = vperm.slane %v919, 0
          %v921 = vmul.f32 %v862, %v920
          %v922 = vmul.f32 %v918, %v920
          %v923 = vadd.f32 %v916, %v921
          %v924 = vadd.f32 %v917, %v922
          %v925 = vld [vmem:[%s792 + $0x1b] sm:$0xff]
          %v926 = vld [vmem:[%s3 + $0x12] sm:$0x1]
          %v927 = vperm.slane %v926, 0
          %v928 = vmul.f32 %v869, %v927
          %v929 = vmul.f32 %v925, %v927
          %v930 = vadd.f32 %v923, %v928
          %v931 = vadd.f32 %v924, %v929
          %v932 = vld [vmem:[%s792 + $0x1c] sm:$0xff]
          %v933 = vld [vmem:[%s3 + $0x13] sm:$0x1]
          %v934 = vperm.slane %v933, 0
          %v935 = vmul.f32 %v876, %v934
          %v936 = vmul.f32 %v932, %v934
          %v937 = vadd.f32 %v930, %v935
          %v938 = vadd.f32 %v931, %v936
          %v939 = vld [vmem:[%s792 + $0x1d] sm:$0xff]
          %v940 = vld [vmem:[%s3 + $0x14] sm:$0x1]
          %v941 = vperm.slane %v940, 0
          %v942 = vmul.f32 %v883, %v941
          %v943 = vmul.f32 %v939, %v941
          %v944 = vadd.f32 %v937, %v942
          %v945 = vadd.f32 %v938, %v943
          %v946 = vld [vmem:[%s792 + $0x1e] sm:$0xff]
          %v947 = vld [vmem:[%s3 + $0x15] sm:$0x1]
          %v948 = vperm.slane %v947, 0
          %v949 = vmul.f32 %v890, %v948
          %v950 = vmul.f32 %v946, %v948
          %v951 = vadd.f32 %v944, %v949
          %v952 = vadd.f32 %v945, %v950
          %v953 = vld [vmem:[%s792 + $0x1f] sm:$0xff]
          %v954 = vld [vmem:[%s3 + $0x16] sm:$0x1]
          %v955 = vperm.slane %v954, 0
          %v956 = vmul.f32 %v897, %v955
          %v957 = vmul.f32 %v953, %v955
          %v958 = vadd.f32 %v951, %v956
          %v959 = vadd.f32 %v952, %v957
          %v960 = vld [vmem:[%s792 + $0x20] sm:$0xff]
          %v961 = vld [vmem:[%s3 + $0x17] sm:$0x1]
          %v962 = vperm.slane %v961, 0
          %v963 = vmul.f32 %v904, %v962
          %v964 = vmul.f32 %v960, %v962
          %v965 = vadd.f32 %v958, %v963
          %v966 = vadd.f32 %v959, %v964
          %v967 = vld [vmem:[%s792 + $0x21] sm:$0xff]
          %v968 = vld [vmem:[%s3 + $0x18] sm:$0x1]
          %v969 = vperm.slane %v968, 0
          %v970 = vmul.f32 %v911, %v969
          %v971 = vmul.f32 %v967, %v969
          %v972 = vadd.f32 %v965, %v970
          %v973 = vadd.f32 %v966, %v971
          %v974 = vld [vmem:[%s792 + $0x22] sm:$0xff]
          %v975 = vld [vmem:[%s3 + $0x19] sm:$0x1]
          %v976 = vperm.slane %v975, 0
          %v977 = vmul.f32 %v918, %v976
          %v978 = vmul.f32 %v974, %v976
          %v979 = vadd.f32 %v972, %v977
          %v980 = vadd.f32 %v973, %v978
          %v981 = vld [vmem:[%s792 + $0x23] sm:$0xff]
          %v982 = vld [vmem:[%s3 + $0x1a] sm:$0x1]
          %v983 = vperm.slane %v982, 0
          %v984 = vmul.f32 %v925, %v983
          %v985 = vmul.f32 %v981, %v983
          %v986 = vadd.f32 %v979, %v984
          %v987 = vadd.f32 %v980, %v985
          %v988 = vld [vmem:[%s792 + $0x24] sm:$0xff]
          %v989 = vld [vmem:[%s3 + $0x1b] sm:$0x1]
          %v990 = vperm.slane %v989, 0
          %v991 = vmul.f32 %v932, %v990
          %v992 = vmul.f32 %v988, %v990
          %v993 = vadd.f32 %v986, %v991
          %v994 = vadd.f32 %v987, %v992
          %v995 = vld [vmem:[%s792 + $0x25] sm:$0xff]
          %v996 = vld [vmem:[%s3 + $0x1c] sm:$0x1]
          %v997 = vperm.slane %v996, 0
          %v998 = vmul.f32 %v939, %v997
          %v999 = vmul.f32 %v995, %v997
          %v1000 = vadd.f32 %v993, %v998
          %v1001 = vadd.f32 %v994, %v999
          %v1002 = vld [vmem:[%s792 + $0x26] sm:$0xff]
          %v1003 = vld [vmem:[%s3 + $0x1d] sm:$0x1]
          %v1004 = vperm.slane %v1003, 0
          %v1005 = vmul.f32 %v946, %v1004
          %v1006 = vmul.f32 %v1002, %v1004
          %v1007 = vadd.f32 %v1000, %v1005
          %v1008 = vadd.f32 %v1001, %v1006
          %v1009 = vld [vmem:[%s792 + $0x27] sm:$0xff]
          %v1010 = vld [vmem:[%s3 + $0x1e] sm:$0x1]
          %v1011 = vperm.slane %v1010, 0
          %v1012 = vmul.f32 %v953, %v1011
          %v1013 = vmul.f32 %v1009, %v1011
          %v1014 = vadd.f32 %v1007, %v1012
          %v1015 = vadd.f32 %v1008, %v1013
          %v1016 = vld [vmem:[%s4] sm:$0x1]
          %v1018 = vperm.slane %v1016, 0
          %v1020 = vadd.f32 %v1014, %v1018
          %v1021 = vadd.f32 %v1015, %v1018
          %v1022 = vxor.u32 %v1020, 2147483648
          %v1023 = vxor.u32 %v1021, 2147483648
          %v1024 = vmul.f32 %v1022, 1.442695
          %v1025 = vpow.pop %v1024
          %v1026 = vmul.f32 %v1023, 1.442695
          %v1027 = vpow.pop %v1026
          %v1028 = vadd.f32 %v1025, 1.0
          %v1029 = vadd.f32 %v1027, 1.0
          %v1030 = vrcp.pop %v1028
          %v1031 = vmul.f32 %v1028, %v1030
          %v1032 = vsub.f32 1.0, %v1031
          %v1033 = vmul.f32 %v1030, %v1032
          %v1034 = vadd.f32 %v1030, %v1033
          %vm1035 = vweird.f32 %v1028
          %vm1036 = vweird.f32 %v1030
          %vm1037 = vmor %vm1035, %vm1036
          %v1038 = vsel %vm1037, %v1030, %v1034
          %v1039 = vand.u32 2147483647, %v1028
          %vm1040 = vcmp.eq.f32.partialorder %v1039, 8.507059e+37
          %v1041 = vand.u32 %v1028, 2147483648
          %v1042 = vor.u32 1.1754944e-38, %v1041
          %v1043 = vsel %vm1040, %v1042, %v1038
          %v1044 = vmul.f32 1.0, %v1043
          %v1045 = vrcp.pop %v1029
          %v1046 = vmul.f32 %v1029, %v1045
          %v1047 = vsub.f32 1.0, %v1046
          %v1048 = vmul.f32 %v1045, %v1047
          %v1049 = vadd.f32 %v1045, %v1048
          %vm1050 = vweird.f32 %v1029
          %vm1051 = vweird.f32 %v1045
          %vm1052 = vmor %vm1050, %vm1051
          %v1053 = vsel %vm1052, %v1045, %v1049
          %v1054 = vand.u32 2147483647, %v1029
          %vm1055 = vcmp.eq.f32.partialorder %v1054, 8.507059e+37
          %v1056 = vand.u32 %v1029, 2147483648
          %v1057 = vor.u32 1.1754944e-38, %v1056
          %v1058 = vsel %vm1055, %v1057, %v1053
          %v1059 = vmul.f32 1.0, %v1058
          %v1060 = vmul.f32 %v1020, %v1044
          %v1061 = vmul.f32 %v1021, %v1059
          %v1062 = vpack.c.bf16 %v1061, %v1060
          %v1063 = vld [vmem:[%s5] sm:$0xf]
          %v1064 = vld [vmem:[%s5 + $0x4] sm:$0xf]
          %v1065 = vld [vmem:[%s5 + $0x8] sm:$0xf]
          %v1066 = vld [vmem:[%s5 + $0xc] sm:$0xf]
          %v1067 = vld [vmem:[%s5 + $0x10] sm:$0xf]
          %v1068 = vld [vmem:[%s5 + $0x14] sm:$0xf]
          %v1069 = vld [vmem:[%s5 + $0x18] sm:$0xf]
          %v1070 = vld [vmem:[%s5 + $0x1c] sm:$0xf]
          %v1071 = vld [vmem:[%s5 + $0x20] sm:$0xf]
          %v1072 = vld [vmem:[%s5 + $0x24] sm:$0xf]
          %v1073 = vld [vmem:[%s5 + $0x28] sm:$0xf]
          %v1074 = vld [vmem:[%s5 + $0x2c] sm:$0xf]
          %v1075 = vld [vmem:[%s5 + $0x30] sm:$0xf]
          %v1076 = vld [vmem:[%s5 + $0x34] sm:$0xf]
          %v1077 = vld [vmem:[%s5 + $0x38] sm:$0xf]
          %v1078 = vld [vmem:[%s5 + $0x3c] sm:$0xf]
          %v1079 = vld [vmem:[%s6] sm:$0x1]
          %v1081 = vperm.slane %v1079, 0
          %v1099 = vunpack.c.l.b16 %v1063
          %v1100 = vunpack.c.l.b16 %v1064
          %v1101 = vunpack.c.l.b16 %v1065
          %v1102 = vunpack.c.l.b16 %v1066
          %v1103 = vunpack.c.l.b16 %v1067
          %v1104 = vunpack.c.l.b16 %v1068
          %v1105 = vunpack.c.l.b16 %v1069
          %v1106 = vunpack.c.l.b16 %v1070
          %v1107 = vunpack.c.l.b16 %v1071
          %v1108 = vunpack.c.l.b16 %v1072
          %v1109 = vunpack.c.l.b16 %v1073
          %v1110 = vunpack.c.l.b16 %v1074
          %v1111 = vunpack.c.l.b16 %v1075
          %v1112 = vunpack.c.l.b16 %v1076
          %v1113 = vunpack.c.l.b16 %v1077
          %v1114 = vunpack.c.l.b16 %v1078
          %v1115 = vpack.c.b16 %v1100, %v1099
          %v1116 = vpack.c.b16 %v1102, %v1101
          %v1117 = vpack.c.b16 %v1104, %v1103
          %v1118 = vpack.c.b16 %v1106, %v1105
          %v1119 = vpack.c.b16 %v1108, %v1107
          %v1120 = vpack.c.b16 %v1110, %v1109
          %v1121 = vpack.c.b16 %v1112, %v1111
          %v1122 = vpack.c.b16 %v1114, %v1113
          %1131 = vmatpush.bf16.msra.mxu0 %v1122
          %1132 = vmatpush.bf16.msra.mxu0 %v1121
          %1133 = vmatpush.bf16.msra.mxu0 %v1120
          %1134 = vmatpush.bf16.msra.mxu0 %v1119
          %1135 = vmatpush.bf16.msra.mxu0 %v1118
          %1136 = vmatpush.bf16.msra.mxu0 %v1117
          %1137 = vmatpush.bf16.msra.mxu0 %v1116
          %1138 = vmatpush.bf16.msra.mxu0 %v1115
          %1139 = vmatmul.bf16.gmra.mxu0 %v1062
          %v1140 = vpop.f32.mrf.mxu0
          %v1141 = vadd.f32 %v1081, %v1140
          %v1142 = vpop.f32.mrf.mxu0
          %v1143 = vadd.f32 %v1081, %v1142
          %1144 = vdwg.mxu0
          %s1145 = smul.u32 %s786, 16
          %s1146 = scalar_lea.vmem %s299, %s1145 [#allocation6]
          %1147 = vst.msk [vmem:[%s1146] sm:$0xff] %vm768, %v1141
          %1148 = vst.msk [vmem:[%s1146 + $0x8] sm:$0xff] %vm768, %v1143
        $region57: #{tpu_custom_call.1} parent=47 // loop_footer
          %s790 = sadd.s32 1, %s786
        $region58: #{tpu_custom_call.1} parent=47 // loop_footer_branch
          %785 = sbr.rel target = $region54
        $region59: #{tpu_custom_call.1} parent=47 // loop_exit
          _
        %s1149 = sand.u32 %s184, 1
        %s1150 = scalar_lea.sflag [#allocation5], %s1149
        %s1151 = sand.u32 %s184, 1
        %s1152 = smul.addr %s1151, 32
        %s1153 = scalar_lea.vmem [#allocation6], %s1152
        // Predicated region
        $region60: #{tpu_custom_call.1} parent=47 // pred_check
          %p1154 = pneg %p194
        $region61: #{tpu_custom_call.1} parent=47 // pred_check_branch
          %1156 = sbr.rel (%p1154) target = $region63
        $region62: #{tpu_custom_call.1} parent=47 // pred_region
          %s1157 = smul.u32 2, %s24
          %1159 = vsyncadd %s1150, 0
          %s1160 = smul.addr %s1157, 2
          %s1161 = smul.addr %s1160, 8
          %s1162 = scalar_lea.hbm %s7, %s1161
          %s1163 = sshll.u32 %s1153, 4
          %s1164 = int_to_ptr.vmem [resolvable:$true] %s1163
          %s1165 = sshll.u32 %s1162, 4
          %s1166 = int_to_ptr.hbm [resolvable:$true] %s1165
          %1171 = dma.vmem_to_hbm [thread:$0]  %s1164, 512, %s1166, %s1150, 128, 128, 8
        $region63: #{tpu_custom_call.1} parent=47 // pred_fallthru
          _
      $region48: #{tpu_custom_call.1} parent=5 // pred_fallthru
        _
      %p1172 = scmp.le.s32.totalorder 2, %s19
      // Predicated region
      $region64: #{tpu_custom_call.1} parent=5 // pred_check
        %p1173 = pneg %p1172
      $region65: #{tpu_custom_call.1} parent=5 // pred_check_branch
        %1175 = sbr.rel (%p1173) target = $region67
      $region66: #{tpu_custom_call.1} parent=5 // pred_region
        %s1176 = ssub.s32 %s19, 2
        // Predicated region
        $region68: #{tpu_custom_call.1} parent=66 // pred_check
          %p1177 = pneg %p200
        $region69: #{tpu_custom_call.1} parent=66 // pred_check_branch
          %1179 = sbr.rel (%p1177) target = $region71
        $region70: #{tpu_custom_call.1} parent=66 // pred_region
          %s1180 = sand.u32 %s185, 1
          %s1181 = scalar_lea.sflag [#allocation5], %s1180
          %s1182 = sand.u32 %s185, 1
          %s1183 = smul.addr %s1182, 32
          %s1184 = scalar_lea.vmem [#allocation6], %s1183
          %1186 = dma.done %s1181, 512
        $region71: #{tpu_custom_call.1} parent=66 // pred_fallthru
          _
      $region67: #{tpu_custom_call.1} parent=5 // pred_fallthru
        _
    $region6: #{tpu_custom_call.1} parent=1 // loop_footer
      %s23 = sadd.s32 1, %s19
    $region7: #{tpu_custom_call.1} parent=1 // loop_footer_branch
      %18 = sbr.rel target = $region3
    $region8: #{tpu_custom_call.1} parent=1 // loop_exit
      _
    %1187 = vsyncpa [#allocation4], 1
    %s1188 = scalar_lea.sflag [#allocation4], 1
    %1189 = vsyncpa %s1188, 1
    %1190 = vsyncpa [#allocation5], 1
    %s1191 = scalar_lea.sflag [#allocation5], 1
    %1192 = vsyncpa %s1191, 1

</llo_original>
